<compile_context>
chip_gen: v7x
topology: tpu7x:2x2x1
jax: 0.10.0
libtpu: 0.0.40
codegen_flags: <defaults>
</compile_context>

<pallas_src>
import functools

import jax
import jax.numpy as jnp
import numpy as np
from jax.experimental import pallas as pl
from jax.experimental.pallas import tpu as pltpu

_VMEM_TILE_BUDGET = 16 * 1024 * 1024   # in+out blocks, double-buffered (safe on v5e/v6e/v7x)
_VMEM_LIMIT_BYTES = 48 * 1024 * 1024   # raised scoped-VMEM limit (v5e default is only 16 MiB)


# ---------------------------------------------------------------------------
# Style path: DenseBlock (linear, no bias) + WScale (x*scale + bias), linear act.
# Operands are tiny, so whole arrays live in VMEM as single blocks (no grid).
# ---------------------------------------------------------------------------
def _style_dense_kernel(w_ref, wt_ref, b_ref, o_ref, *, scale):
    o_ref[...] = (
        jnp.dot(
            w_ref[...],
            wt_ref[...],
            preferred_element_type=jnp.float32,
            precision=jax.lax.Precision.HIGHEST,
        )
        * scale
        + b_ref[...]
    ).astype(o_ref.dtype)


# ---------------------------------------------------------------------------
# Fused epilogue kernel on a lane-dense (ROWS, H*W) view; each row is one (n, c)
# instance, so the instance-norm reduction is a per-row reduction over axis -1.
# params row = [noise_weight[c], bias[c], style_scale[n,c] + 1, style_shift[n,c]].
# ---------------------------------------------------------------------------
def _epilogue_kernel(params_ref, noise_ref, x_ref, o_ref, *, epsilon):
    x = x_ref[...].astype(jnp.float32)           # (ROWS, HW)
    noise = noise_ref[...].astype(jnp.float32)   # (1, HW), broadcast over rows
    p = params_ref[...].astype(jnp.float32)      # (ROWS, 4)

    noise_w = p[:, 0:1]
    bias = p[:, 1:2]
    style_a = p[:, 2:3]
    style_b = p[:, 3:4]

    # NoiseApplyingLayer + per-channel bias
    x = x + noise * noise_w + bias
    # LeakyReLU(negative_slope=0.2)
    x = jnp.where(x >= 0.0, x, 0.2 * x)
    # InstanceNorm (two-pass centered form for stability; rsqrt -> EUP slot)
    mean = jnp.mean(x, axis=-1, keepdims=True)
    xc = x - mean
    var = jnp.mean(xc * xc, axis=-1, keepdims=True)
    y = xc * jax.lax.rsqrt(var + epsilon)
    # Style modulation: x * (style[:, 0] + 1) + style[:, 1]
    y = y * style_a + style_b
    o_ref[...] = y.astype(o_ref.dtype)


def _pick_block_rows(total_rows, hw, itemsize):
    """Largest ROWS that keeps double-buffered in+out blocks under the VMEM budget,
    divides N*C exactly, and is sublane-aligned (x8) or covers the whole axis."""
    per_row_bytes = 2 * 2 * hw * max(int(itemsize), 4)   # 2 bufs x (in + out)
    cap = max(1, _VMEM_TILE_BUDGET // per_row_bytes)
    if total_rows <= cap:
        return total_rows
    best = 0
    d = 1
    while d * d <= total_rows:
        if total_rows % d == 0:
            for cand in (d, total_rows // d):
                if cand <= cap and cand % 8 == 0 and cand > best:
                    best = cand
        d += 1
    if best == 0:
        # No sublane-aligned divisor fits; fall back to the largest divisor that fits.
        for cand in range(min(cap, total_rows), 0, -1):
            if total_rows % cand == 0:
                best = cand
                break
    return best


def epilogue_block(x, w, noise, noise_weight, bias, style_weight, style_bias,
                   *, epsilon=1e-08):
    """EpilogueBlock forward (randomize_noise=False, normalization='instance')."""
    if x.ndim != 4:
        raise ValueError(
            f"The input tensor should be with shape [batch_size, num_channels, "
            f"height, width], but {x.shape} received!")
    N, C, H, W = x.shape
    HW = H * W
    total_rows = N * C
    w_dim = w.shape[1]

    # --- style = DenseBlock(w): (w @ W^T) * (1/sqrt(fan_in)) + bias, linear act ---
    wscale = 1.0 / np.sqrt(float(w_dim))           # gain=1.0, kernel_size=1, lr_mult=1.0
    style = pl.pallas_call(
        functools.partial(_style_dense_kernel, scale=wscale),
        out_shape=jax.ShapeDtypeStruct((N, 2 * C), jnp.float32),
    )(
        w.astype(jnp.float32),
        jnp.transpose(style_weight).astype(jnp.float32),   # (w_dim, 2C)
        style_bias.reshape(1, 2 * C).astype(jnp.float32),
    )
    style = style.reshape(N, 2, C)

    # --- per-row (per (n, c)) scalar params, packed into one small array ---
    params = jnp.stack(
        [
            jnp.tile(noise_weight.astype(jnp.float32), N),   # weight[c]
            jnp.tile(bias.astype(jnp.float32), N),           # bias[c]
            (style[:, 0] + 1.0).reshape(total_rows),         # scale
            style[:, 1].reshape(total_rows),                 # shift
        ],
        axis=-1,
    )  # (N*C, 4)

    # --- lane-dense views (pure reshapes, no copies) ---
    x_flat = x.reshape(total_rows, HW)
    noise_flat = noise.reshape(1, HW)

    rows_blk = _pick_block_rows(total_rows, HW, jnp.dtype(x.dtype).itemsize)
    grid = (total_rows // rows_blk,)

    out_flat = pl.pallas_call(
        functools.partial(_epilogue_kernel, epsilon=epsilon),
        out_shape=jax.ShapeDtypeStruct((total_rows, HW), x.dtype),
        grid_spec=pltpu.PrefetchScalarGridSpec(
            num_scalar_prefetch=0,
            grid=grid,
            in_specs=[
                pl.BlockSpec((rows_blk, 4), lambda i: (i, 0)),
                pl.BlockSpec((1, HW), lambda i: (0, 0)),
                pl.BlockSpec((rows_blk, HW), lambda i: (i, 0)),
            ],
            out_specs=pl.BlockSpec((rows_blk, HW), lambda i: (i, 0)),
        ),
        compiler_params=pltpu.CompilerParams(
            dimension_semantics=("parallel",),
            vmem_limit_bytes=_VMEM_LIMIT_BYTES,
        ),
    )(params, noise_flat, x_flat)

    return out_flat.reshape(N, C, H, W)


# ---------------------------------------------------------------------------
# Pure-JAX reference mirroring the PyTorch EpilogueBlock forward.
# ---------------------------------------------------------------------------
def _reference_epilogue(x, w, noise, noise_weight, bias, style_weight, style_bias,
                        epsilon=1e-08):
    N, C, H, W = x.shape
    w_dim = w.shape[1]
    x1 = x + noise * noise_weight.reshape(1, -1, 1, 1)
    x2 = x1 + bias.reshape(1, -1, 1, 1)
    x3 = jnp.where(x2 >= 0.0, x2, 0.2 * x2)
    m = jnp.mean(x3, axis=(2, 3), keepdims=True)
    xc = x3 - m
    v = jnp.mean(xc * xc, axis=(2, 3), keepdims=True)
    x4 = xc / jnp.sqrt(v + epsilon)
    style = (jnp.dot(w, style_weight.T, precision=jax.lax.Precision.HIGHEST)
             * (1.0 / np.sqrt(float(w_dim))) + style_bias)
    style = style.reshape(N, 2, C, 1, 1)
    return x4 * (style[:, 0] + 1.0) + style[:, 1]


if __name__ == "__main__":
    # TODO(synk): randomize_noise=True path (fresh torch.randn per call) is not
    # implemented; this follows the default randomize_noise=False buffer path.
    N, C, H, W = 2, 4, 16, 16
    W_DIM = 512          # StyleModulationLayer default w_dim
    # layer_idx=4 -> res = 2**(4//2 + 2) = 16 = H = W

    keys = jax.random.split(jax.random.PRNGKey(0), 7)
    x = jax.random.normal(keys[0], (N, C, H, W), dtype=jnp.float32)
    w = jax.random.normal(keys[1], (N, W_DIM), dtype=jnp.float32)
    noise = jax.random.normal(keys[2], (1, 1, H, W), dtype=jnp.float32)
    noise_weight = 0.1 * jax.random.normal(keys[3], (C,), dtype=jnp.float32)
    bias = 0.1 * jax.random.normal(keys[4], (C,), dtype=jnp.float32)
    style_weight = 0.02 * jax.random.normal(keys[5], (2 * C, W_DIM), dtype=jnp.float32)
    style_bias = 0.1 * jax.random.normal(keys[6], (2 * C,), dtype=jnp.float32)

    out = epilogue_block(x, w, noise, noise_weight, bias, style_weight, style_bias)
    out = jax.block_until_ready(out)

    ref = _reference_epilogue(x, w, noise, noise_weight, bias, style_weight, style_bias)
    assert out.shape == ref.shape and out.dtype == ref.dtype
    max_err = float(jnp.max(jnp.abs(out - ref)))
    assert jnp.allclose(out, ref, atol=1e-4, rtol=1e-4), f"mismatch vs reference: {max_err}"

    print("KERNEL_OK")
</pallas_src>

<mosaic_0001>
module attributes {stable_mosaic.version = 11 : i64} {
  func.func @_style_dense_kernel(%arg0: memref<2x512xf32, #tpu.memory_space<vmem>>, %arg1: memref<512x8xf32, #tpu.memory_space<vmem>>, %arg2: memref<1x8xf32, #tpu.memory_space<vmem>>, %arg3: memref<2x8xf32, #tpu.memory_space<vmem>>) attributes {dimension_semantics = [], scalar_prefetch = 0 : i64, scratch_operands = 0 : i64, tpu.core_type = #tpu.core_type<tc>} {
    %c0 = arith.constant 0 : index
    %c0_0 = arith.constant 0 : index
    %0 = vector.load %arg0[%c0, %c0_0] : memref<2x512xf32, #tpu.memory_space<vmem>>, vector<2x512xf32>
    %c0_1 = arith.constant 0 : index
    %c0_2 = arith.constant 0 : index
    %1 = vector.load %arg1[%c0_1, %c0_2] : memref<512x8xf32, #tpu.memory_space<vmem>>, vector<512x8xf32>
    %cst = arith.constant dense<0.000000e+00> : vector<2x8xf32>
    %2 = tpu.matmul %0, %1, %cst {dimension_numbers = #tpu.dot_dimension_numbers<[1], [0], [0], [1], [0, 0, 1, 1], [], []>, precision = #tpu.contract_precision<fp32>} : vector<2x512xf32>, vector<512x8xf32>, vector<2x8xf32> -> vector<2x8xf32>
    %cst_3 = arith.constant 0.0441941731 : f32
    %3 = vector.broadcast %cst_3 : f32 to vector<2x8xf32>
    %4 = arith.mulf %2, %3 : vector<2x8xf32>
    %c0_4 = arith.constant 0 : index
    %c0_5 = arith.constant 0 : index
    %5 = vector.load %arg2[%c0_4, %c0_5] : memref<1x8xf32, #tpu.memory_space<vmem>>, vector<1x8xf32>
    %6 = vector.broadcast %5 : vector<1x8xf32> to vector<2x8xf32>
    %7 = arith.addf %4, %6 : vector<2x8xf32>
    %c0_6 = arith.constant 0 : index
    %c0_7 = arith.constant 0 : index
    %8 = vector.load %arg3[%c0_6, %c0_7] : memref<2x8xf32, #tpu.memory_space<vmem>>, vector<2x8xf32>
    tpu.vector_store %arg3[%c0_6, %c0_7], %7 {strides = array<i32>} : memref<2x8xf32, #tpu.memory_space<vmem>>, vector<2x8xf32>,
    return
  }
}

</mosaic_0001>

<llo_original>
// kernel: tpu_custom_call.1
$region0: #{tpu_custom_call.1}
  #allocation0 [shape = 'u32[]', space=smem, size = 0x4, offset = 0x4, fixed_abs, tag = 'smem constant byte address 0x4 - core index']
  #allocation1 [shape = 'u32[144,128]{1,0:T(1,128)}', space=vmem, size = 0x12000, scoped, tag = 'internal scratch']
  %s0 = inlined_call_operand.vmem [shape: f32[2,512], index: 0, kind: input, shape index: {}]
  %s1 = inlined_call_operand.vmem [shape: f32[512,8], index: 1, kind: input, shape index: {}]
  %s2 = inlined_call_operand.vmem [shape: f32[1,8], index: 2, kind: input, shape index: {}]
  %s3 = inlined_call_operand.hbm [shape: f32[2,8], index: 3, kind: output, shape index: {}]
  %s4 = sld [smem:[#allocation0]]
  $region22: #{tpu_custom_call.1} parent=0
    _
  %s6 = ssub.s32 1, %s4
  %s7 = scalar_select 0, %s6, %s4
  $region1: #{tpu_custom_call.1} parent=0
    #allocation2 [shape = 'u8[1024]{0}', space=vmem, size = 0x400, scoped, tag = 'output window, operand 0, single buffered']
    #allocation3 [shape = 's32[1]{0}', space=sflag, size = 0x4, scoped, tag = 'scoped memory for tpu_custom_call.1']
    %8 = vsyncpa [#allocation3], 0
    // Predicated region
    $region2: #{tpu_custom_call.1} parent=1 // pred_check
      _
    $region3: #{tpu_custom_call.1} parent=1 // pred_check_branch
      %10 = sbr.rel (0) target = $region5
    $region4: #{tpu_custom_call.1} parent=1 // pred_region
      _
    $region5: #{tpu_custom_call.1} parent=1 // pred_fallthru
      _
    // Predicated region
    $region6: #{tpu_custom_call.1} parent=1 // pred_check
      _
    $region7: #{tpu_custom_call.1} parent=1 // pred_check_branch
      %12 = sbr.rel (0) target = $region9
    $region8: #{tpu_custom_call.1} parent=1 // pred_region
      _
    $region9: #{tpu_custom_call.1} parent=1 // pred_fallthru
      _
    // Predicated region
    $region10: #{tpu_custom_call.1} parent=1 // pred_check
      _
    $region11: #{tpu_custom_call.1} parent=1 // pred_check_branch
      %14 = sbr.rel (0) target = $region13
    $region12: #{tpu_custom_call.1} parent=1 // pred_region
      _
    $region13: #{tpu_custom_call.1} parent=1 // pred_fallthru
      _
    %v15 = vld [vmem:[%s0] sm:$0xff]
    %v16 = vld [vmem:[%s1] sm:$0xff]
    %v17 = vld [vmem:[%s1 + $0x8] sm:$0xff]
    %v18 = vld [vmem:[%s1 + $0x10] sm:$0xff]
    %v19 = vld [vmem:[%s1 + $0x18] sm:$0xff]
    %v20 = vld [vmem:[%s1 + $0x20] sm:$0xff]
    %v21 = vld [vmem:[%s1 + $0x28] sm:$0xff]
    %v22 = vld [vmem:[%s1 + $0x30] sm:$0xff]
    %v23 = vld [vmem:[%s1 + $0x38] sm:$0xff]
    %v24 = vld [vmem:[%s1 + $0x40] sm:$0xff]
    %v25 = vld [vmem:[%s1 + $0x48] sm:$0xff]
    %v26 = vld [vmem:[%s1 + $0x50] sm:$0xff]
    %v27 = vld [vmem:[%s1 + $0x58] sm:$0xff]
    %v28 = vld [vmem:[%s1 + $0x60] sm:$0xff]
    %v29 = vld [vmem:[%s1 + $0x68] sm:$0xff]
    %v30 = vld [vmem:[%s1 + $0x70] sm:$0xff]
    %v31 = vld [vmem:[%s1 + $0x78] sm:$0xff]
    %v32 = vld [vmem:[%s1 + $0x80] sm:$0xff]
    %v33 = vld [vmem:[%s1 + $0x88] sm:$0xff]
    %v34 = vld [vmem:[%s1 + $0x90] sm:$0xff]
    %v35 = vld [vmem:[%s1 + $0x98] sm:$0xff]
    %v36 = vld [vmem:[%s1 + $0xa0] sm:$0xff]
    %v37 = vld [vmem:[%s1 + $0xa8] sm:$0xff]
    %v38 = vld [vmem:[%s1 + $0xb0] sm:$0xff]
    %v39 = vld [vmem:[%s1 + $0xb8] sm:$0xff]
    %v40 = vld [vmem:[%s1 + $0xc0] sm:$0xff]
    %v41 = vld [vmem:[%s1 + $0xc8] sm:$0xff]
    %v42 = vld [vmem:[%s1 + $0xd0] sm:$0xff]
    %v43 = vld [vmem:[%s1 + $0xd8] sm:$0xff]
    %v44 = vld [vmem:[%s1 + $0xe0] sm:$0xff]
    %v45 = vld [vmem:[%s1 + $0xe8] sm:$0xff]
    %v46 = vld [vmem:[%s1 + $0xf0] sm:$0xff]
    %v47 = vld [vmem:[%s1 + $0xf8] sm:$0xff]
    %v48 = vld [vmem:[%s1 + $0x100] sm:$0xff]
    %v49 = vld [vmem:[%s1 + $0x108] sm:$0xff]
    %v50 = vld [vmem:[%s1 + $0x110] sm:$0xff]
    %v51 = vld [vmem:[%s1 + $0x118] sm:$0xff]
    %v52 = vld [vmem:[%s1 + $0x120] sm:$0xff]
    %v53 = vld [vmem:[%s1 + $0x128] sm:$0xff]
    %v54 = vld [vmem:[%s1 + $0x130] sm:$0xff]
    %v55 = vld [vmem:[%s1 + $0x138] sm:$0xff]
    %v56 = vld [vmem:[%s1 + $0x140] sm:$0xff]
    %v57 = vld [vmem:[%s1 + $0x148] sm:$0xff]
    %v58 = vld [vmem:[%s1 + $0x150] sm:$0xff]
    %v59 = vld [vmem:[%s1 + $0x158] sm:$0xff]
    %v60 = vld [vmem:[%s1 + $0x160] sm:$0xff]
    %v61 = vld [vmem:[%s1 + $0x168] sm:$0xff]
    %v62 = vld [vmem:[%s1 + $0x170] sm:$0xff]
    %v63 = vld [vmem:[%s1 + $0x178] sm:$0xff]
    %v64 = vld [vmem:[%s1 + $0x180] sm:$0xff]
    %v65 = vld [vmem:[%s1 + $0x188] sm:$0xff]
    %v66 = vld [vmem:[%s1 + $0x190] sm:$0xff]
    %v67 = vld [vmem:[%s1 + $0x198] sm:$0xff]
    %v68 = vld [vmem:[%s1 + $0x1a0] sm:$0xff]
    %v69 = vld [vmem:[%s1 + $0x1a8] sm:$0xff]
    %v70 = vld [vmem:[%s1 + $0x1b0] sm:$0xff]
    %v71 = vld [vmem:[%s1 + $0x1b8] sm:$0xff]
    %v72 = vld [vmem:[%s1 + $0x1c0] sm:$0xff]
    %v73 = vld [vmem:[%s1 + $0x1c8] sm:$0xff]
    %v74 = vld [vmem:[%s1 + $0x1d0] sm:$0xff]
    %v75 = vld [vmem:[%s1 + $0x1d8] sm:$0xff]
    %v76 = vld [vmem:[%s1 + $0x1e0] sm:$0xff]
    %v77 = vld [vmem:[%s1 + $0x1e8] sm:$0xff]
    %v78 = vld [vmem:[%s1 + $0x1f0] sm:$0xff]
    %v79 = vld [vmem:[%s1 + $0x1f8] sm:$0xff]
    %v81 = vcombine.high %v15, %v15
    %v83 = vunpack.c.l.s4 1983009808
    %v84 = vunpack.c.0.s8 %v83
    %v85 = vlaneseq
    %v86 = vshrl.u32 %v85, 7
    %v87 = vsub.s32 %v84, %v86
    %v88 = vrot.slane %v15, %v87
    %v90 = vunpack.c.l.s4 1983009808
    %v91 = vunpack.c.0.s8 %v90
    %v92 = vlaneseq
    %v93 = vshrl.u32 %v92, 7
    %v94 = vsub.s32 %v91, %v93
    %v95 = vrot.slane %v81, %v94
    %v96 = vcombine.high %v88, %v88
    %v97 = vcombine.high %v95, %v95
    %102 = vmatprep.subr.mxu0 0.0
    %v103 = vand.u32 %v16, 4294901760
    %104 = vmatpush1.msra.mxu0 %v103
    %105 = vmatprep.subr.mxu0 0.0
    %v106 = vand.u32 %v17, 4294901760
    %107 = vmatpush1.msra.mxu0 %v106
    %108 = vmatprep.subr.mxu0 0.0
    %v109 = vand.u32 %v18, 4294901760
    %110 = vmatpush1.msra.mxu0 %v109
    %111 = vmatprep.subr.mxu0 0.0
    %v112 = vand.u32 %v19, 4294901760
    %113 = vmatpush1.msra.mxu0 %v112
    %114 = vmatprep.subr.mxu0 0.0
    %v115 = vand.u32 %v20, 4294901760
    %116 = vmatpush1.msra.mxu0 %v115
    %117 = vmatprep.subr.mxu0 0.0
    %v118 = vand.u32 %v21, 4294901760
    %119 = vmatpush1.msra.mxu0 %v118
    %120 = vmatprep.subr.mxu0 0.0
    %v121 = vand.u32 %v22, 4294901760
    %122 = vmatpush1.msra.mxu0 %v121
    %123 = vmatprep.subr.mxu0 0.0
    %v124 = vand.u32 %v23, 4294901760
    %125 = vmatpush1.msra.mxu0 %v124
    %126 = vmatprep.subr.mxu0 0.0
    %v127 = vand.u32 %v24, 4294901760
    %128 = vmatpush1.msra.mxu0 %v127
    %129 = vmatprep.subr.mxu0 0.0
    %v130 = vand.u32 %v25, 4294901760
    %131 = vmatpush1.msra.mxu0 %v130
    %132 = vmatprep.subr.mxu0 0.0
    %v133 = vand.u32 %v26, 4294901760
    %134 = vmatpush1.msra.mxu0 %v133
    %135 = vmatprep.subr.mxu0 0.0
    %v136 = vand.u32 %v27, 4294901760
    %137 = vmatpush1.msra.mxu0 %v136
    %138 = vmatprep.subr.mxu0 0.0
    %v139 = vand.u32 %v28, 4294901760
    %140 = vmatpush1.msra.mxu0 %v139
    %141 = vmatprep.subr.mxu0 0.0
    %v142 = vand.u32 %v29, 4294901760
    %143 = vmatpush1.msra.mxu0 %v142
    %144 = vmatprep.subr.mxu0 0.0
    %v145 = vand.u32 %v30, 4294901760
    %146 = vmatpush1.msra.mxu0 %v145
    %147 = vmatprep.subr.mxu0 0.0
    %v148 = vand.u32 %v31, 4294901760
    %149 = vmatpush1.msra.mxu0 %v148
    %150 = vmatprep.subr.mxu0 0.0
    %v151 = vand.u32 %v32, 4294901760
    %152 = vmatpush1.msra.mxu0 %v151
    %153 = vmatprep.subr.mxu0 0.0
    %v154 = vand.u32 %v33, 4294901760
    %155 = vmatpush1.msra.mxu0 %v154
    %156 = vmatprep.subr.mxu0 0.0
    %v157 = vand.u32 %v34, 4294901760
    %158 = vmatpush1.msra.mxu0 %v157
    %159 = vmatprep.subr.mxu0 0.0
    %v160 = vand.u32 %v35, 4294901760
    %161 = vmatpush1.msra.mxu0 %v160
    %162 = vmatprep.subr.mxu0 0.0
    %v163 = vand.u32 %v36, 4294901760
    %164 = vmatpush1.msra.mxu0 %v163
    %165 = vmatprep.subr.mxu0 0.0
    %v166 = vand.u32 %v37, 4294901760
    %167 = vmatpush1.msra.mxu0 %v166
    %168 = vmatprep.subr.mxu0 0.0
    %v169 = vand.u32 %v38, 4294901760
    %170 = vmatpush1.msra.mxu0 %v169
    %171 = vmatprep.subr.mxu0 0.0
    %v172 = vand.u32 %v39, 4294901760
    %173 = vmatpush1.msra.mxu0 %v172
    %174 = vmatprep.subr.mxu0 0.0
    %v175 = vand.u32 %v40, 4294901760
    %176 = vmatpush1.msra.mxu0 %v175
    %177 = vmatprep.subr.mxu0 0.0
    %v178 = vand.u32 %v41, 4294901760
    %179 = vmatpush1.msra.mxu0 %v178
    %180 = vmatprep.subr.mxu0 0.0
    %v181 = vand.u32 %v42, 4294901760
    %182 = vmatpush1.msra.mxu0 %v181
    %183 = vmatprep.subr.mxu0 0.0
    %v184 = vand.u32 %v43, 4294901760
    %185 = vmatpush1.msra.mxu0 %v184
    %186 = vmatprep.subr.mxu0 0.0
    %v187 = vand.u32 %v44, 4294901760
    %188 = vmatpush1.msra.mxu0 %v187
    %189 = vmatprep.subr.mxu0 0.0
    %v190 = vand.u32 %v45, 4294901760
    %191 = vmatpush1.msra.mxu0 %v190
    %192 = vmatprep.subr.mxu0 0.0
    %v193 = vand.u32 %v46, 4294901760
    %194 = vmatpush1.msra.mxu0 %v193
    %195 = vmatprep.subr.mxu0 0.0
    %v196 = vand.u32 %v47, 4294901760
    %197 = vmatpush1.msra.mxu0 %v196
    %v198 = vand.u32 %v96, 4294901760
    %v199 = vsub.f32 %v96, %v198
    %v200 = vand.u32 %v199, 4294901760
    %v201 = vsub.f32 %v199, %v200
    %v202 = vand.u32 %v201, 4294901760
    %203 = vmatprep.mubr.f32.mxu0 %v202
    %v204 = vand.u32 %v88, 4294901760
    %v205 = vsub.f32 %v88, %v204
    %v206 = vand.u32 %v205, 4294901760
    %v207 = vsub.f32 %v205, %v206
    %v208 = vand.u32 %v207, 4294901760
    %209 = vmatmul.mubr.f32.gmra.mrb[0].mxu0 %v208
    %v210 = vpop.f32.mrb[0].mxu0
    %v211 = vadd.f32 0.0, %v210
    %v212 = vpop.f32.mrb[0].mxu0
    %213 = vdwg.mxu0
    %214 = vmatprep.subr.mxu0 0.0
    %v215 = vand.u32 %v16, 4294901760
    %v216 = vsub.f32 %v16, %v215
    %v217 = vand.u32 %v216, 4294901760
    %v218 = vsub.f32 %v216, %v217
    %v219 = vand.u32 %v218, 4294901760
    %220 = vmatpush1.msra.mxu0 %v219
    %221 = vmatprep.subr.mxu0 0.0
    %v222 = vand.u32 %v17, 4294901760
    %v223 = vsub.f32 %v17, %v222
    %v224 = vand.u32 %v223, 4294901760
    %v225 = vsub.f32 %v223, %v224
    %v226 = vand.u32 %v225, 4294901760
    %227 = vmatpush1.msra.mxu0 %v226
    %228 = vmatprep.subr.mxu0 0.0
    %v229 = vand.u32 %v18, 4294901760
    %v230 = vsub.f32 %v18, %v229
    %v231 = vand.u32 %v230, 4294901760
    %v232 = vsub.f32 %v230, %v231
    %v233 = vand.u32 %v232, 4294901760
    %234 = vmatpush1.msra.mxu0 %v233
    %235 = vmatprep.subr.mxu0 0.0
    %v236 = vand.u32 %v19, 4294901760
    %v237 = vsub.f32 %v19, %v236
    %v238 = vand.u32 %v237, 4294901760
    %v239 = vsub.f32 %v237, %v238
    %v240 = vand.u32 %v239, 4294901760
    %241 = vmatpush1.msra.mxu0 %v240
    %242 = vmatprep.subr.mxu0 0.0
    %v243 = vand.u32 %v20, 4294901760
    %v244 = vsub.f32 %v20, %v243
    %v245 = vand.u32 %v244, 4294901760
    %v246 = vsub.f32 %v244, %v245
    %v247 = vand.u32 %v246, 4294901760
    %248 = vmatpush1.msra.mxu0 %v247
    %249 = vmatprep.subr.mxu0 0.0
    %v250 = vand.u32 %v21, 4294901760
    %v251 = vsub.f32 %v21, %v250
    %v252 = vand.u32 %v251, 4294901760
    %v253 = vsub.f32 %v251, %v252
    %v254 = vand.u32 %v253, 4294901760
    %255 = vmatpush1.msra.mxu0 %v254
    %256 = vmatprep.subr.mxu0 0.0
    %v257 = vand.u32 %v22, 4294901760
    %v258 = vsub.f32 %v22, %v257
    %v259 = vand.u32 %v258, 4294901760
    %v260 = vsub.f32 %v258, %v259
    %v261 = vand.u32 %v260, 4294901760
    %262 = vmatpush1.msra.mxu0 %v261
    %263 = vmatprep.subr.mxu0 0.0
    %v264 = vand.u32 %v23, 4294901760
    %v265 = vsub.f32 %v23, %v264
    %v266 = vand.u32 %v265, 4294901760
    %v267 = vsub.f32 %v265, %v266
    %v268 = vand.u32 %v267, 4294901760
    %269 = vmatpush1.msra.mxu0 %v268
    %270 = vmatprep.subr.mxu0 0.0
    %v271 = vand.u32 %v24, 4294901760
    %v272 = vsub.f32 %v24, %v271
    %v273 = vand.u32 %v272, 4294901760
    %v274 = vsub.f32 %v272, %v273
    %v275 = vand.u32 %v274, 4294901760
    %276 = vmatpush1.msra.mxu0 %v275
    %277 = vmatprep.subr.mxu0 0.0
    %v278 = vand.u32 %v25, 4294901760
    %v279 = vsub.f32 %v25, %v278
    %v280 = vand.u32 %v279, 4294901760
    %v281 = vsub.f32 %v279, %v280
    %v282 = vand.u32 %v281, 4294901760
    %283 = vmatpush1.msra.mxu0 %v282
    %284 = vmatprep.subr.mxu0 0.0
    %v285 = vand.u32 %v26, 4294901760
    %v286 = vsub.f32 %v26, %v285
    %v287 = vand.u32 %v286, 4294901760
    %v288 = vsub.f32 %v286, %v287
    %v289 = vand.u32 %v288, 4294901760
    %290 = vmatpush1.msra.mxu0 %v289
    %291 = vmatprep.subr.mxu0 0.0
    %v292 = vand.u32 %v27, 4294901760
    %v293 = vsub.f32 %v27, %v292
    %v294 = vand.u32 %v293, 4294901760
    %v295 = vsub.f32 %v293, %v294
    %v296 = vand.u32 %v295, 4294901760
    %297 = vmatpush1.msra.mxu0 %v296
    %298 = vmatprep.subr.mxu0 0.0
    %v299 = vand.u32 %v28, 4294901760
    %v300 = vsub.f32 %v28, %v299
    %v301 = vand.u32 %v300, 4294901760
    %v302 = vsub.f32 %v300, %v301
    %v303 = vand.u32 %v302, 4294901760
    %304 = vmatpush1.msra.mxu0 %v303
    %305 = vmatprep.subr.mxu0 0.0
    %v306 = vand.u32 %v29, 4294901760
    %v307 = vsub.f32 %v29, %v306
    %v308 = vand.u32 %v307, 4294901760
    %v309 = vsub.f32 %v307, %v308
    %v310 = vand.u32 %v309, 4294901760
    %311 = vmatpush1.msra.mxu0 %v310
    %312 = vmatprep.subr.mxu0 0.0
    %v313 = vand.u32 %v30, 4294901760
    %v314 = vsub.f32 %v30, %v313
    %v315 = vand.u32 %v314, 4294901760
    %v316 = vsub.f32 %v314, %v315
    %v317 = vand.u32 %v316, 4294901760
    %318 = vmatpush1.msra.mxu0 %v317
    %319 = vmatprep.subr.mxu0 0.0
    %v320 = vand.u32 %v31, 4294901760
    %v321 = vsub.f32 %v31, %v320
    %v322 = vand.u32 %v321, 4294901760
    %v323 = vsub.f32 %v321, %v322
    %v324 = vand.u32 %v323, 4294901760
    %325 = vmatpush1.msra.mxu0 %v324
    %326 = vmatprep.subr.mxu0 0.0
    %v327 = vand.u32 %v32, 4294901760
    %v328 = vsub.f32 %v32, %v327
    %v329 = vand.u32 %v328, 4294901760
    %v330 = vsub.f32 %v328, %v329
    %v331 = vand.u32 %v330, 4294901760
    %332 = vmatpush1.msra.mxu0 %v331
    %333 = vmatprep.subr.mxu0 0.0
    %v334 = vand.u32 %v33, 4294901760
    %v335 = vsub.f32 %v33, %v334
    %v336 = vand.u32 %v335, 4294901760
    %v337 = vsub.f32 %v335, %v336
    %v338 = vand.u32 %v337, 4294901760
    %339 = vmatpush1.msra.mxu0 %v338
    %340 = vmatprep.subr.mxu0 0.0
    %v341 = vand.u32 %v34, 4294901760
    %v342 = vsub.f32 %v34, %v341
    %v343 = vand.u32 %v342, 4294901760
    %v344 = vsub.f32 %v342, %v343
    %v345 = vand.u32 %v344, 4294901760
    %346 = vmatpush1.msra.mxu0 %v345
    %347 = vmatprep.subr.mxu0 0.0
    %v348 = vand.u32 %v35, 4294901760
    %v349 = vsub.f32 %v35, %v348
    %v350 = vand.u32 %v349, 4294901760
    %v351 = vsub.f32 %v349, %v350
    %v352 = vand.u32 %v351, 4294901760
    %353 = vmatpush1.msra.mxu0 %v352
    %354 = vmatprep.subr.mxu0 0.0
    %v355 = vand.u32 %v36, 4294901760
    %v356 = vsub.f32 %v36, %v355
    %v357 = vand.u32 %v356, 4294901760
    %v358 = vsub.f32 %v356, %v357
    %v359 = vand.u32 %v358, 4294901760
    %360 = vmatpush1.msra.mxu0 %v359
    %361 = vmatprep.subr.mxu0 0.0
    %v362 = vand.u32 %v37, 4294901760
    %v363 = vsub.f32 %v37, %v362
    %v364 = vand.u32 %v363, 4294901760
    %v365 = vsub.f32 %v363, %v364
    %v366 = vand.u32 %v365, 4294901760
    %367 = vmatpush1.msra.mxu0 %v366
    %368 = vmatprep.subr.mxu0 0.0
    %v369 = vand.u32 %v38, 4294901760
    %v370 = vsub.f32 %v38, %v369
    %v371 = vand.u32 %v370, 4294901760
    %v372 = vsub.f32 %v370, %v371
    %v373 = vand.u32 %v372, 4294901760
    %374 = vmatpush1.msra.mxu0 %v373
    %375 = vmatprep.subr.mxu0 0.0
    %v376 = vand.u32 %v39, 4294901760
    %v377 = vsub.f32 %v39, %v376
    %v378 = vand.u32 %v377, 4294901760
    %v379 = vsub.f32 %v377, %v378
    %v380 = vand.u32 %v379, 4294901760
    %381 = vmatpush1.msra.mxu0 %v380
    %382 = vmatprep.subr.mxu0 0.0
    %v383 = vand.u32 %v40, 4294901760
    %v384 = vsub.f32 %v40, %v383
    %v385 = vand.u32 %v384, 4294901760
    %v386 = vsub.f32 %v384, %v385
    %v387 = vand.u32 %v386, 4294901760
    %388 = vmatpush1.msra.mxu0 %v387
    %389 = vmatprep.subr.mxu0 0.0
    %v390 = vand.u32 %v41, 4294901760
    %v391 = vsub.f32 %v41, %v390
    %v392 = vand.u32 %v391, 4294901760
    %v393 = vsub.f32 %v391, %v392
    %v394 = vand.u32 %v393, 4294901760
    %395 = vmatpush1.msra.mxu0 %v394
    %396 = vmatprep.subr.mxu0 0.0
    %v397 = vand.u32 %v42, 4294901760
    %v398 = vsub.f32 %v42, %v397
    %v399 = vand.u32 %v398, 4294901760
    %v400 = vsub.f32 %v398, %v399
    %v401 = vand.u32 %v400, 4294901760
    %402 = vmatpush1.msra.mxu0 %v401
    %403 = vmatprep.subr.mxu0 0.0
    %v404 = vand.u32 %v43, 4294901760
    %v405 = vsub.f32 %v43, %v404
    %v406 = vand.u32 %v405, 4294901760
    %v407 = vsub.f32 %v405, %v406
    %v408 = vand.u32 %v407, 4294901760
    %409 = vmatpush1.msra.mxu0 %v408
    %410 = vmatprep.subr.mxu0 0.0
    %v411 = vand.u32 %v44, 4294901760
    %v412 = vsub.f32 %v44, %v411
    %v413 = vand.u32 %v412, 4294901760
    %v414 = vsub.f32 %v412, %v413
    %v415 = vand.u32 %v414, 4294901760
    %416 = vmatpush1.msra.mxu0 %v415
    %417 = vmatprep.subr.mxu0 0.0
    %v418 = vand.u32 %v45, 4294901760
    %v419 = vsub.f32 %v45, %v418
    %v420 = vand.u32 %v419, 4294901760
    %v421 = vsub.f32 %v419, %v420
    %v422 = vand.u32 %v421, 4294901760
    %423 = vmatpush1.msra.mxu0 %v422
    %424 = vmatprep.subr.mxu0 0.0
    %v425 = vand.u32 %v46, 4294901760
    %v426 = vsub.f32 %v46, %v425
    %v427 = vand.u32 %v426, 4294901760
    %v428 = vsub.f32 %v426, %v427
    %v429 = vand.u32 %v428, 4294901760
    %430 = vmatpush1.msra.mxu0 %v429
    %431 = vmatprep.subr.mxu0 0.0
    %v432 = vand.u32 %v47, 4294901760
    %v433 = vsub.f32 %v47, %v432
    %v434 = vand.u32 %v433, 4294901760
    %v435 = vsub.f32 %v433, %v434
    %v436 = vand.u32 %v435, 4294901760
    %437 = vmatpush1.msra.mxu0 %v436
    %v438 = vand.u32 %v96, 4294901760
    %439 = vmatprep.mubr.f32.mxu0 %v438
    %v440 = vand.u32 %v88, 4294901760
    %441 = vmatmul.mubr.f32.gmra.mrb[0].mxu0 %v440
    %v442 = vpop.f32.mrb[0].mxu0
    %v443 = vadd.f32 %v211, %v442
    %v444 = vpop.f32.mrb[0].mxu0
    %445 = vdwg.mxu0
    %446 = vmatprep.subr.mxu0 0.0
    %v447 = vand.u32 %v16, 4294901760
    %v448 = vsub.f32 %v16, %v447
    %449 = vmatpush1.msra.mxu0 %v448
    %450 = vmatprep.subr.mxu0 0.0
    %v451 = vand.u32 %v17, 4294901760
    %v452 = vsub.f32 %v17, %v451
    %453 = vmatpush1.msra.mxu0 %v452
    %454 = vmatprep.subr.mxu0 0.0
    %v455 = vand.u32 %v18, 4294901760
    %v456 = vsub.f32 %v18, %v455
    %457 = vmatpush1.msra.mxu0 %v456
    %458 = vmatprep.subr.mxu0 0.0
    %v459 = vand.u32 %v19, 4294901760
    %v460 = vsub.f32 %v19, %v459
    %461 = vmatpush1.msra.mxu0 %v460
    %462 = vmatprep.subr.mxu0 0.0
    %v463 = vand.u32 %v20, 4294901760
    %v464 = vsub.f32 %v20, %v463
    %465 = vmatpush1.msra.mxu0 %v464
    %466 = vmatprep.subr.mxu0 0.0
    %v467 = vand.u32 %v21, 4294901760
    %v468 = vsub.f32 %v21, %v467
    %469 = vmatpush1.msra.mxu0 %v468
    %470 = vmatprep.subr.mxu0 0.0
    %v471 = vand.u32 %v22, 4294901760
    %v472 = vsub.f32 %v22, %v471
    %473 = vmatpush1.msra.mxu0 %v472
    %474 = vmatprep.subr.mxu0 0.0
    %v475 = vand.u32 %v23, 4294901760
    %v476 = vsub.f32 %v23, %v475
    %477 = vmatpush1.msra.mxu0 %v476
    %478 = vmatprep.subr.mxu0 0.0
    %v479 = vand.u32 %v24, 4294901760
    %v480 = vsub.f32 %v24, %v479
    %481 = vmatpush1.msra.mxu0 %v480
    %482 = vmatprep.subr.mxu0 0.0
    %v483 = vand.u32 %v25, 4294901760
    %v484 = vsub.f32 %v25, %v483
    %485 = vmatpush1.msra.mxu0 %v484
    %486 = vmatprep.subr.mxu0 0.0
    %v487 = vand.u32 %v26, 4294901760
    %v488 = vsub.f32 %v26, %v487
    %489 = vmatpush1.msra.mxu0 %v488
    %490 = vmatprep.subr.mxu0 0.0
    %v491 = vand.u32 %v27, 4294901760
    %v492 = vsub.f32 %v27, %v491
    %493 = vmatpush1.msra.mxu0 %v492
    %494 = vmatprep.subr.mxu0 0.0
    %v495 = vand.u32 %v28, 4294901760
    %v496 = vsub.f32 %v28, %v495
    %497 = vmatpush1.msra.mxu0 %v496
    %498 = vmatprep.subr.mxu0 0.0
    %v499 = vand.u32 %v29, 4294901760
    %v500 = vsub.f32 %v29, %v499
    %501 = vmatpush1.msra.mxu0 %v500
    %502 = vmatprep.subr.mxu0 0.0
    %v503 = vand.u32 %v30, 4294901760
    %v504 = vsub.f32 %v30, %v503
    %505 = vmatpush1.msra.mxu0 %v504
    %506 = vmatprep.subr.mxu0 0.0
    %v507 = vand.u32 %v31, 4294901760
    %v508 = vsub.f32 %v31, %v507
    %509 = vmatpush1.msra.mxu0 %v508
    %510 = vmatprep.subr.mxu0 0.0
    %v511 = vand.u32 %v32, 4294901760
    %v512 = vsub.f32 %v32, %v511
    %513 = vmatpush1.msra.mxu0 %v512
    %514 = vmatprep.subr.mxu0 0.0
    %v515 = vand.u32 %v33, 4294901760
    %v516 = vsub.f32 %v33, %v515
    %517 = vmatpush1.msra.mxu0 %v516
    %518 = vmatprep.subr.mxu0 0.0
    %v519 = vand.u32 %v34, 4294901760
    %v520 = vsub.f32 %v34, %v519
    %521 = vmatpush1.msra.mxu0 %v520
    %522 = vmatprep.subr.mxu0 0.0
    %v523 = vand.u32 %v35, 4294901760
    %v524 = vsub.f32 %v35, %v523
    %525 = vmatpush1.msra.mxu0 %v524
    %526 = vmatprep.subr.mxu0 0.0
    %v527 = vand.u32 %v36, 4294901760
    %v528 = vsub.f32 %v36, %v527
    %529 = vmatpush1.msra.mxu0 %v528
    %530 = vmatprep.subr.mxu0 0.0
    %v531 = vand.u32 %v37, 4294901760
    %v532 = vsub.f32 %v37, %v531
    %533 = vmatpush1.msra.mxu0 %v532
    %534 = vmatprep.subr.mxu0 0.0
    %v535 = vand.u32 %v38, 4294901760
    %v536 = vsub.f32 %v38, %v535
    %537 = vmatpush1.msra.mxu0 %v536
    %538 = vmatprep.subr.mxu0 0.0
    %v539 = vand.u32 %v39, 4294901760
    %v540 = vsub.f32 %v39, %v539
    %541 = vmatpush1.msra.mxu0 %v540
    %542 = vmatprep.subr.mxu0 0.0
    %v543 = vand.u32 %v40, 4294901760
    %v544 = vsub.f32 %v40, %v543
    %545 = vmatpush1.msra.mxu0 %v544
    %546 = vmatprep.subr.mxu0 0.0
    %v547 = vand.u32 %v41, 4294901760
    %v548 = vsub.f32 %v41, %v547
    %549 = vmatpush1.msra.mxu0 %v548
    %550 = vmatprep.subr.mxu0 0.0
    %v551 = vand.u32 %v42, 4294901760
    %v552 = vsub.f32 %v42, %v551
    %553 = vmatpush1.msra.mxu0 %v552
    %554 = vmatprep.subr.mxu0 0.0
    %v555 = vand.u32 %v43, 4294901760
    %v556 = vsub.f32 %v43, %v555
    %557 = vmatpush1.msra.mxu0 %v556
    %558 = vmatprep.subr.mxu0 0.0
    %v559 = vand.u32 %v44, 4294901760
    %v560 = vsub.f32 %v44, %v559
    %561 = vmatpush1.msra.mxu0 %v560
    %562 = vmatprep.subr.mxu0 0.0
    %v563 = vand.u32 %v45, 4294901760
    %v564 = vsub.f32 %v45, %v563
    %565 = vmatpush1.msra.mxu0 %v564
    %566 = vmatprep.subr.mxu0 0.0
    %v567 = vand.u32 %v46, 4294901760
    %v568 = vsub.f32 %v46, %v567
    %569 = vmatpush1.msra.mxu0 %v568
    %570 = vmatprep.subr.mxu0 0.0
    %v571 = vand.u32 %v47, 4294901760
    %v572 = vsub.f32 %v47, %v571
    %573 = vmatpush1.msra.mxu0 %v572
    %v574 = vand.u32 %v96, 4294901760
    %v575 = vsub.f32 %v96, %v574
    %576 = vmatprep.mubr.f32.mxu0 %v575
    %v577 = vand.u32 %v88, 4294901760
    %v578 = vsub.f32 %v88, %v577
    %579 = vmatmul.mubr.f32.gmra.mrb[0].mxu0 %v578
    %v580 = vpop.f32.mrb[0].mxu0
    %v581 = vadd.f32 %v443, %v580
    %v582 = vpop.f32.mrb[0].mxu0
    %583 = vdwg.mxu0
    %584 = vmatprep.subr.mxu0 0.0
    %v585 = vand.u32 %v16, 4294901760
    %586 = vmatpush1.msra.mxu0 %v585
    %587 = vmatprep.subr.mxu0 0.0
    %v588 = vand.u32 %v17, 4294901760
    %589 = vmatpush1.msra.mxu0 %v588
    %590 = vmatprep.subr.mxu0 0.0
    %v591 = vand.u32 %v18, 4294901760
    %592 = vmatpush1.msra.mxu0 %v591
    %593 = vmatprep.subr.mxu0 0.0
    %v594 = vand.u32 %v19, 4294901760
    %595 = vmatpush1.msra.mxu0 %v594
    %596 = vmatprep.subr.mxu0 0.0
    %v597 = vand.u32 %v20, 4294901760
    %598 = vmatpush1.msra.mxu0 %v597
    %599 = vmatprep.subr.mxu0 0.0
    %v600 = vand.u32 %v21, 4294901760
    %601 = vmatpush1.msra.mxu0 %v600
    %602 = vmatprep.subr.mxu0 0.0
    %v603 = vand.u32 %v22, 4294901760
    %604 = vmatpush1.msra.mxu0 %v603
    %605 = vmatprep.subr.mxu0 0.0
    %v606 = vand.u32 %v23, 4294901760
    %607 = vmatpush1.msra.mxu0 %v606
    %608 = vmatprep.subr.mxu0 0.0
    %v609 = vand.u32 %v24, 4294901760
    %610 = vmatpush1.msra.mxu0 %v609
    %611 = vmatprep.subr.mxu0 0.0
    %v612 = vand.u32 %v25, 4294901760
    %613 = vmatpush1.msra.mxu0 %v612
    %614 = vmatprep.subr.mxu0 0.0
    %v615 = vand.u32 %v26, 4294901760
    %616 = vmatpush1.msra.mxu0 %v615
    %617 = vmatprep.subr.mxu0 0.0
    %v618 = vand.u32 %v27, 4294901760
    %619 = vmatpush1.msra.mxu0 %v618
    %620 = vmatprep.subr.mxu0 0.0
    %v621 = vand.u32 %v28, 4294901760
    %622 = vmatpush1.msra.mxu0 %v621
    %623 = vmatprep.subr.mxu0 0.0
    %v624 = vand.u32 %v29, 4294901760
    %625 = vmatpush1.msra.mxu0 %v624
    %626 = vmatprep.subr.mxu0 0.0
    %v627 = vand.u32 %v30, 4294901760
    %628 = vmatpush1.msra.mxu0 %v627
    %629 = vmatprep.subr.mxu0 0.0
    %v630 = vand.u32 %v31, 4294901760
    %631 = vmatpush1.msra.mxu0 %v630
    %632 = vmatprep.subr.mxu0 0.0
    %v633 = vand.u32 %v32, 4294901760
    %634 = vmatpush1.msra.mxu0 %v633
    %635 = vmatprep.subr.mxu0 0.0
    %v636 = vand.u32 %v33, 4294901760
    %637 = vmatpush1.msra.mxu0 %v636
    %638 = vmatprep.subr.mxu0 0.0
    %v639 = vand.u32 %v34, 4294901760
    %640 = vmatpush1.msra.mxu0 %v639
    %641 = vmatprep.subr.mxu0 0.0
    %v642 = vand.u32 %v35, 4294901760
    %643 = vmatpush1.msra.mxu0 %v642
    %644 = vmatprep.subr.mxu0 0.0
    %v645 = vand.u32 %v36, 4294901760
    %646 = vmatpush1.msra.mxu0 %v645
    %647 = vmatprep.subr.mxu0 0.0
    %v648 = vand.u32 %v37, 4294901760
    %649 = vmatpush1.msra.mxu0 %v648
    %650 = vmatprep.subr.mxu0 0.0
    %v651 = vand.u32 %v38, 4294901760
    %652 = vmatpush1.msra.mxu0 %v651
    %653 = vmatprep.subr.mxu0 0.0
    %v654 = vand.u32 %v39, 4294901760
    %655 = vmatpush1.msra.mxu0 %v654
    %656 = vmatprep.subr.mxu0 0.0
    %v657 = vand.u32 %v40, 4294901760
    %658 = vmatpush1.msra.mxu0 %v657
    %659 = vmatprep.subr.mxu0 0.0
    %v660 = vand.u32 %v41, 4294901760
    %661 = vmatpush1.msra.mxu0 %v660
    %662 = vmatprep.subr.mxu0 0.0
    %v663 = vand.u32 %v42, 4294901760
    %664 = vmatpush1.msra.mxu0 %v663
    %665 = vmatprep.subr.mxu0 0.0
    %v666 = vand.u32 %v43, 4294901760
    %667 = vmatpush1.msra.mxu0 %v666
    %668 = vmatprep.subr.mxu0 0.0
    %v669 = vand.u32 %v44, 4294901760
    %670 = vmatpush1.msra.mxu0 %v669
    %671 = vmatprep.subr.mxu0 0.0
    %v672 = vand.u32 %v45, 4294901760
    %673 = vmatpush1.msra.mxu0 %v672
    %674 = vmatprep.subr.mxu0 0.0
    %v675 = vand.u32 %v46, 4294901760
    %676 = vmatpush1.msra.mxu0 %v675
    %677 = vmatprep.subr.mxu0 0.0
    %v678 = vand.u32 %v47, 4294901760
    %679 = vmatpush1.msra.mxu0 %v678
    %v680 = vand.u32 %v96, 4294901760
    %v681 = vsub.f32 %v96, %v680
    %v682 = vand.u32 %v681, 4294901760
    %683 = vmatprep.mubr.f32.mxu0 %v682
    %v684 = vand.u32 %v88, 4294901760
    %v685 = vsub.f32 %v88, %v684
    %v686 = vand.u32 %v685, 4294901760
    %687 = vmatmul.mubr.f32.gmra.mrb[0].mxu0 %v686
    %v688 = vpop.f32.mrb[0].mxu0
    %v689 = vadd.f32 %v581, %v688
    %v690 = vpop.f32.mrb[0].mxu0
    %691 = vdwg.mxu0
    %692 = vmatprep.subr.mxu0 0.0
    %v693 = vand.u32 %v16, 4294901760
    %v694 = vsub.f32 %v16, %v693
    %v695 = vand.u32 %v694, 4294901760
    %696 = vmatpush1.msra.mxu0 %v695
    %697 = vmatprep.subr.mxu0 0.0
    %v698 = vand.u32 %v17, 4294901760
    %v699 = vsub.f32 %v17, %v698
    %v700 = vand.u32 %v699, 4294901760
    %701 = vmatpush1.msra.mxu0 %v700
    %702 = vmatprep.subr.mxu0 0.0
    %v703 = vand.u32 %v18, 4294901760
    %v704 = vsub.f32 %v18, %v703
    %v705 = vand.u32 %v704, 4294901760
    %706 = vmatpush1.msra.mxu0 %v705
    %707 = vmatprep.subr.mxu0 0.0
    %v708 = vand.u32 %v19, 4294901760
    %v709 = vsub.f32 %v19, %v708
    %v710 = vand.u32 %v709, 4294901760
    %711 = vmatpush1.msra.mxu0 %v710
    %712 = vmatprep.subr.mxu0 0.0
    %v713 = vand.u32 %v20, 4294901760
    %v714 = vsub.f32 %v20, %v713
    %v715 = vand.u32 %v714, 4294901760
    %716 = vmatpush1.msra.mxu0 %v715
    %717 = vmatprep.subr.mxu0 0.0
    %v718 = vand.u32 %v21, 4294901760
    %v719 = vsub.f32 %v21, %v718
    %v720 = vand.u32 %v719, 4294901760
    %721 = vmatpush1.msra.mxu0 %v720
    %722 = vmatprep.subr.mxu0 0.0
    %v723 = vand.u32 %v22, 4294901760
    %v724 = vsub.f32 %v22, %v723
    %v725 = vand.u32 %v724, 4294901760
    %726 = vmatpush1.msra.mxu0 %v725
    %727 = vmatprep.subr.mxu0 0.0
    %v728 = vand.u32 %v23, 4294901760
    %v729 = vsub.f32 %v23, %v728
    %v730 = vand.u32 %v729, 4294901760
    %731 = vmatpush1.msra.mxu0 %v730
    %732 = vmatprep.subr.mxu0 0.0
    %v733 = vand.u32 %v24, 4294901760
    %v734 = vsub.f32 %v24, %v733
    %v735 = vand.u32 %v734, 4294901760
    %736 = vmatpush1.msra.mxu0 %v735
    %737 = vmatprep.subr.mxu0 0.0
    %v738 = vand.u32 %v25, 4294901760
    %v739 = vsub.f32 %v25, %v738
    %v740 = vand.u32 %v739, 4294901760
    %741 = vmatpush1.msra.mxu0 %v740
    %742 = vmatprep.subr.mxu0 0.0
    %v743 = vand.u32 %v26, 4294901760
    %v744 = vsub.f32 %v26, %v743
    %v745 = vand.u32 %v744, 4294901760
    %746 = vmatpush1.msra.mxu0 %v745
    %747 = vmatprep.subr.mxu0 0.0
    %v748 = vand.u32 %v27, 4294901760
    %v749 = vsub.f32 %v27, %v748
    %v750 = vand.u32 %v749, 4294901760
    %751 = vmatpush1.msra.mxu0 %v750
    %752 = vmatprep.subr.mxu0 0.0
    %v753 = vand.u32 %v28, 4294901760
    %v754 = vsub.f32 %v28, %v753
    %v755 = vand.u32 %v754, 4294901760
    %756 = vmatpush1.msra.mxu0 %v755
    %757 = vmatprep.subr.mxu0 0.0
    %v758 = vand.u32 %v29, 4294901760
    %v759 = vsub.f32 %v29, %v758
    %v760 = vand.u32 %v759, 4294901760
    %761 = vmatpush1.msra.mxu0 %v760
    %762 = vmatprep.subr.mxu0 0.0
    %v763 = vand.u32 %v30, 4294901760
    %v764 = vsub.f32 %v30, %v763
    %v765 = vand.u32 %v764, 4294901760
    %766 = vmatpush1.msra.mxu0 %v765
    %767 = vmatprep.subr.mxu0 0.0
    %v768 = vand.u32 %v31, 4294901760
    %v769 = vsub.f32 %v31, %v768
    %v770 = vand.u32 %v769, 4294901760
    %771 = vmatpush1.msra.mxu0 %v770
    %772 = vmatprep.subr.mxu0 0.0
    %v773 = vand.u32 %v32, 4294901760
    %v774 = vsub.f32 %v32, %v773
    %v775 = vand.u32 %v774, 4294901760
    %776 = vmatpush1.msra.mxu0 %v775
    %777 = vmatprep.subr.mxu0 0.0
    %v778 = vand.u32 %v33, 4294901760
    %v779 = vsub.f32 %v33, %v778
    %v780 = vand.u32 %v779, 4294901760
    %781 = vmatpush1.msra.mxu0 %v780
    %782 = vmatprep.subr.mxu0 0.0
    %v783 = vand.u32 %v34, 4294901760
    %v784 = vsub.f32 %v34, %v783
    %v785 = vand.u32 %v784, 4294901760
    %786 = vmatpush1.msra.mxu0 %v785
    %787 = vmatprep.subr.mxu0 0.0
    %v788 = vand.u32 %v35, 4294901760
    %v789 = vsub.f32 %v35, %v788
    %v790 = vand.u32 %v789, 4294901760
    %791 = vmatpush1.msra.mxu0 %v790
    %792 = vmatprep.subr.mxu0 0.0
    %v793 = vand.u32 %v36, 4294901760
    %v794 = vsub.f32 %v36, %v793
    %v795 = vand.u32 %v794, 4294901760
    %796 = vmatpush1.msra.mxu0 %v795
    %797 = vmatprep.subr.mxu0 0.0
    %v798 = vand.u32 %v37, 4294901760
    %v799 = vsub.f32 %v37, %v798
    %v800 = vand.u32 %v799, 4294901760
    %801 = vmatpush1.msra.mxu0 %v800
    %802 = vmatprep.subr.mxu0 0.0
    %v803 = vand.u32 %v38, 4294901760
    %v804 = vsub.f32 %v38, %v803
    %v805 = vand.u32 %v804, 4294901760
    %806 = vmatpush1.msra.mxu0 %v805
    %807 = vmatprep.subr.mxu0 0.0
    %v808 = vand.u32 %v39, 4294901760
    %v809 = vsub.f32 %v39, %v808
    %v810 = vand.u32 %v809, 4294901760
    %811 = vmatpush1.msra.mxu0 %v810
    %812 = vmatprep.subr.mxu0 0.0
    %v813 = vand.u32 %v40, 4294901760
    %v814 = vsub.f32 %v40, %v813
    %v815 = vand.u32 %v814, 4294901760
    %816 = vmatpush1.msra.mxu0 %v815
    %817 = vmatprep.subr.mxu0 0.0
    %v818 = vand.u32 %v41, 4294901760
    %v819 = vsub.f32 %v41, %v818
    %v820 = vand.u32 %v819, 4294901760
    %821 = vmatpush1.msra.mxu0 %v820
    %822 = vmatprep.subr.mxu0 0.0
    %v823 = vand.u32 %v42, 4294901760
    %v824 = vsub.f32 %v42, %v823
    %v825 = vand.u32 %v824, 4294901760
    %826 = vmatpush1.msra.mxu0 %v825
    %827 = vmatprep.subr.mxu0 0.0
    %v828 = vand.u32 %v43, 4294901760
    %v829 = vsub.f32 %v43, %v828
    %v830 = vand.u32 %v829, 4294901760
    %831 = vmatpush1.msra.mxu0 %v830
    %832 = vmatprep.subr.mxu0 0.0
    %v833 = vand.u32 %v44, 4294901760
    %v834 = vsub.f32 %v44, %v833
    %v835 = vand.u32 %v834, 4294901760
    %836 = vmatpush1.msra.mxu0 %v835
    %837 = vmatprep.subr.mxu0 0.0
    %v838 = vand.u32 %v45, 4294901760
    %v839 = vsub.f32 %v45, %v838
    %v840 = vand.u32 %v839, 4294901760
    %841 = vmatpush1.msra.mxu0 %v840
    %842 = vmatprep.subr.mxu0 0.0
    %v843 = vand.u32 %v46, 4294901760
    %v844 = vsub.f32 %v46, %v843
    %v845 = vand.u32 %v844, 4294901760
    %846 = vmatpush1.msra.mxu0 %v845
    %847 = vmatprep.subr.mxu0 0.0
    %v848 = vand.u32 %v47, 4294901760
    %v849 = vsub.f32 %v47, %v848
    %v850 = vand.u32 %v849, 4294901760
    %851 = vmatpush1.msra.mxu0 %v850
    %v852 = vand.u32 %v96, 4294901760
    %853 = vmatprep.mubr.f32.mxu0 %v852
    %v854 = vand.u32 %v88, 4294901760
    %855 = vmatmul.mubr.f32.gmra.mrb[0].mxu0 %v854
    %v856 = vpop.f32.mrb[0].mxu0
    %v857 = vadd.f32 %v689, %v856
    %v858 = vpop.f32.mrb[0].mxu0
    %859 = vdwg.mxu0
    %860 = vmatprep.subr.mxu0 0.0
    %v861 = vand.u32 %v16, 4294901760
    %862 = vmatpush1.msra.mxu0 %v861
    %863 = vmatprep.subr.mxu0 0.0
    %v864 = vand.u32 %v17, 4294901760
    %865 = vmatpush1.msra.mxu0 %v864
    %866 = vmatprep.subr.mxu0 0.0
    %v867 = vand.u32 %v18, 4294901760
    %868 = vmatpush1.msra.mxu0 %v867
    %869 = vmatprep.subr.mxu0 0.0
    %v870 = vand.u32 %v19, 4294901760
    %871 = vmatpush1.msra.mxu0 %v870
    %872 = vmatprep.subr.mxu0 0.0
    %v873 = vand.u32 %v20, 4294901760
    %874 = vmatpush1.msra.mxu0 %v873
    %875 = vmatprep.subr.mxu0 0.0
    %v876 = vand.u32 %v21, 4294901760
    %877 = vmatpush1.msra.mxu0 %v876
    %878 = vmatprep.subr.mxu0 0.0
    %v879 = vand.u32 %v22, 4294901760
    %880 = vmatpush1.msra.mxu0 %v879
    %881 = vmatprep.subr.mxu0 0.0
    %v882 = vand.u32 %v23, 4294901760
    %883 = vmatpush1.msra.mxu0 %v882
    %884 = vmatprep.subr.mxu0 0.0
    %v885 = vand.u32 %v24, 4294901760
    %886 = vmatpush1.msra.mxu0 %v885
    %887 = vmatprep.subr.mxu0 0.0
    %v888 = vand.u32 %v25, 4294901760
    %889 = vmatpush1.msra.mxu0 %v888
    %890 = vmatprep.subr.mxu0 0.0
    %v891 = vand.u32 %v26, 4294901760
    %892 = vmatpush1.msra.mxu0 %v891
    %893 = vmatprep.subr.mxu0 0.0
    %v894 = vand.u32 %v27, 4294901760
    %895 = vmatpush1.msra.mxu0 %v894
    %896 = vmatprep.subr.mxu0 0.0
    %v897 = vand.u32 %v28, 4294901760
    %898 = vmatpush1.msra.mxu0 %v897
    %899 = vmatprep.subr.mxu0 0.0
    %v900 = vand.u32 %v29, 4294901760
    %901 = vmatpush1.msra.mxu0 %v900
    %902 = vmatprep.subr.mxu0 0.0
    %v903 = vand.u32 %v30, 4294901760
    %904 = vmatpush1.msra.mxu0 %v903
    %905 = vmatprep.subr.mxu0 0.0
    %v906 = vand.u32 %v31, 4294901760
    %907 = vmatpush1.msra.mxu0 %v906
    %908 = vmatprep.subr.mxu0 0.0
    %v909 = vand.u32 %v32, 4294901760
    %910 = vmatpush1.msra.mxu0 %v909
    %911 = vmatprep.subr.mxu0 0.0
    %v912 = vand.u32 %v33, 4294901760
    %913 = vmatpush1.msra.mxu0 %v912
    %914 = vmatprep.subr.mxu0 0.0
    %v915 = vand.u32 %v34, 4294901760
    %916 = vmatpush1.msra.mxu0 %v915
    %917 = vmatprep.subr.mxu0 0.0
    %v918 = vand.u32 %v35, 4294901760
    %919 = vmatpush1.msra.mxu0 %v918
    %920 = vmatprep.subr.mxu0 0.0
    %v921 = vand.u32 %v36, 4294901760
    %922 = vmatpush1.msra.mxu0 %v921
    %923 = vmatprep.subr.mxu0 0.0
    %v924 = vand.u32 %v37, 4294901760
    %925 = vmatpush1.msra.mxu0 %v924
    %926 = vmatprep.subr.mxu0 0.0
    %v927 = vand.u32 %v38, 4294901760
    %928 = vmatpush1.msra.mxu0 %v927
    %929 = vmatprep.subr.mxu0 0.0
    %v930 = vand.u32 %v39, 4294901760
    %931 = vmatpush1.msra.mxu0 %v930
    %932 = vmatprep.subr.mxu0 0.0
    %v933 = vand.u32 %v40, 4294901760
    %934 = vmatpush1.msra.mxu0 %v933
    %935 = vmatprep.subr.mxu0 0.0
    %v936 = vand.u32 %v41, 4294901760
    %937 = vmatpush1.msra.mxu0 %v936
    %938 = vmatprep.subr.mxu0 0.0
    %v939 = vand.u32 %v42, 4294901760
    %940 = vmatpush1.msra.mxu0 %v939
    %941 = vmatprep.subr.mxu0 0.0
    %v942 = vand.u32 %v43, 4294901760
    %943 = vmatpush1.msra.mxu0 %v942
    %944 = vmatprep.subr.mxu0 0.0
    %v945 = vand.u32 %v44, 4294901760
    %946 = vmatpush1.msra.mxu0 %v945
    %947 = vmatprep.subr.mxu0 0.0
    %v948 = vand.u32 %v45, 4294901760
    %949 = vmatpush1.msra.mxu0 %v948
    %950 = vmatprep.subr.mxu0 0.0
    %v951 = vand.u32 %v46, 4294901760
    %952 = vmatpush1.msra.mxu0 %v951
    %953 = vmatprep.subr.mxu0 0.0
    %v954 = vand.u32 %v47, 4294901760
    %955 = vmatpush1.msra.mxu0 %v954
    %v956 = vand.u32 %v96, 4294901760
    %957 = vmatprep.mubr.f32.mxu0 %v956
    %v958 = vand.u32 %v88, 4294901760
    %959 = vmatmul.mubr.f32.gmra.mrb[0].mxu0 %v958
    %v960 = vpop.f32.mrb[0].mxu0
    %v961 = vadd.f32 %v857, %v960
    %v962 = vpop.f32.mrb[0].mxu0
    %963 = vdwg.mxu0
    %964 = vmatprep.subr.mxu0 0.0
    %v965 = vand.u32 %v48, 4294901760
    %966 = vmatpush1.msra.mxu0 %v965
    %967 = vmatprep.subr.mxu0 0.0
    %v968 = vand.u32 %v49, 4294901760
    %969 = vmatpush1.msra.mxu0 %v968
    %970 = vmatprep.subr.mxu0 0.0
    %v971 = vand.u32 %v50, 4294901760
    %972 = vmatpush1.msra.mxu0 %v971
    %973 = vmatprep.subr.mxu0 0.0
    %v974 = vand.u32 %v51, 4294901760
    %975 = vmatpush1.msra.mxu0 %v974
    %976 = vmatprep.subr.mxu0 0.0
    %v977 = vand.u32 %v52, 4294901760
    %978 = vmatpush1.msra.mxu0 %v977
    %979 = vmatprep.subr.mxu0 0.0
    %v980 = vand.u32 %v53, 4294901760
    %981 = vmatpush1.msra.mxu0 %v980
    %982 = vmatprep.subr.mxu0 0.0
    %v983 = vand.u32 %v54, 4294901760
    %984 = vmatpush1.msra.mxu0 %v983
    %985 = vmatprep.subr.mxu0 0.0
    %v986 = vand.u32 %v55, 4294901760
    %987 = vmatpush1.msra.mxu0 %v986
    %988 = vmatprep.subr.mxu0 0.0
    %v989 = vand.u32 %v56, 4294901760
    %990 = vmatpush1.msra.mxu0 %v989
    %991 = vmatprep.subr.mxu0 0.0
    %v992 = vand.u32 %v57, 4294901760
    %993 = vmatpush1.msra.mxu0 %v992
    %994 = vmatprep.subr.mxu0 0.0
    %v995 = vand.u32 %v58, 4294901760
    %996 = vmatpush1.msra.mxu0 %v995
    %997 = vmatprep.subr.mxu0 0.0
    %v998 = vand.u32 %v59, 4294901760
    %999 = vmatpush1.msra.mxu0 %v998
    %1000 = vmatprep.subr.mxu0 0.0
    %v1001 = vand.u32 %v60, 4294901760
    %1002 = vmatpush1.msra.mxu0 %v1001
    %1003 = vmatprep.subr.mxu0 0.0
    %v1004 = vand.u32 %v61, 4294901760
    %1005 = vmatpush1.msra.mxu0 %v1004
    %1006 = vmatprep.subr.mxu0 0.0
    %v1007 = vand.u32 %v62, 4294901760
    %1008 = vmatpush1.msra.mxu0 %v1007
    %1009 = vmatprep.subr.mxu0 0.0
    %v1010 = vand.u32 %v63, 4294901760
    %1011 = vmatpush1.msra.mxu0 %v1010
    %1012 = vmatprep.subr.mxu0 0.0
    %v1013 = vand.u32 %v64, 4294901760
    %1014 = vmatpush1.msra.mxu0 %v1013
    %1015 = vmatprep.subr.mxu0 0.0
    %v1016 = vand.u32 %v65, 4294901760
    %1017 = vmatpush1.msra.mxu0 %v1016
    %1018 = vmatprep.subr.mxu0 0.0
    %v1019 = vand.u32 %v66, 4294901760
    %1020 = vmatpush1.msra.mxu0 %v1019
    %1021 = vmatprep.subr.mxu0 0.0
    %v1022 = vand.u32 %v67, 4294901760
    %1023 = vmatpush1.msra.mxu0 %v1022
    %1024 = vmatprep.subr.mxu0 0.0
    %v1025 = vand.u32 %v68, 4294901760
    %1026 = vmatpush1.msra.mxu0 %v1025
    %1027 = vmatprep.subr.mxu0 0.0
    %v1028 = vand.u32 %v69, 4294901760
    %1029 = vmatpush1.msra.mxu0 %v1028
    %1030 = vmatprep.subr.mxu0 0.0
    %v1031 = vand.u32 %v70, 4294901760
    %1032 = vmatpush1.msra.mxu0 %v1031
    %1033 = vmatprep.subr.mxu0 0.0
    %v1034 = vand.u32 %v71, 4294901760
    %1035 = vmatpush1.msra.mxu0 %v1034
    %1036 = vmatprep.subr.mxu0 0.0
    %v1037 = vand.u32 %v72, 4294901760
    %1038 = vmatpush1.msra.mxu0 %v1037
    %1039 = vmatprep.subr.mxu0 0.0
    %v1040 = vand.u32 %v73, 4294901760
    %1041 = vmatpush1.msra.mxu0 %v1040
    %1042 = vmatprep.subr.mxu0 0.0
    %v1043 = vand.u32 %v74, 4294901760
    %1044 = vmatpush1.msra.mxu0 %v1043
    %1045 = vmatprep.subr.mxu0 0.0
    %v1046 = vand.u32 %v75, 4294901760
    %1047 = vmatpush1.msra.mxu0 %v1046
    %1048 = vmatprep.subr.mxu0 0.0
    %v1049 = vand.u32 %v76, 4294901760
    %1050 = vmatpush1.msra.mxu0 %v1049
    %1051 = vmatprep.subr.mxu0 0.0
    %v1052 = vand.u32 %v77, 4294901760
    %1053 = vmatpush1.msra.mxu0 %v1052
    %1054 = vmatprep.subr.mxu0 0.0
    %v1055 = vand.u32 %v78, 4294901760
    %1056 = vmatpush1.msra.mxu0 %v1055
    %1057 = vmatprep.subr.mxu0 0.0
    %v1058 = vand.u32 %v79, 4294901760
    %1059 = vmatpush1.msra.mxu0 %v1058
    %v1060 = vand.u32 %v97, 4294901760
    %v1061 = vsub.f32 %v97, %v1060
    %v1062 = vand.u32 %v1061, 4294901760
    %v1063 = vsub.f32 %v1061, %v1062
    %v1064 = vand.u32 %v1063, 4294901760
    %1065 = vmatprep.mubr.f32.mxu0 %v1064
    %v1066 = vand.u32 %v95, 4294901760
    %v1067 = vsub.f32 %v95, %v1066
    %v1068 = vand.u32 %v1067, 4294901760
    %v1069 = vsub.f32 %v1067, %v1068
    %v1070 = vand.u32 %v1069, 4294901760
    %1071 = vmatmul.mubr.f32.gmra.mrb[0].mxu0 %v1070
    %v1072 = vpop.f32.mrb[0].mxu0
    %v1073 = vadd.f32 %v961, %v1072
    %v1074 = vpop.f32.mrb[0].mxu0
    %1075 = vdwg.mxu0
    %1076 = vmatprep.subr.mxu0 0.0
    %v1077 = vand.u32 %v48, 4294901760
    %v1078 = vsub.f32 %v48, %v1077
    %v1079 = vand.u32 %v1078, 4294901760
    %v1080 = vsub.f32 %v1078, %v1079
    %v1081 = vand.u32 %v1080, 4294901760
    %1082 = vmatpush1.msra.mxu0 %v1081
    %1083 = vmatprep.subr.mxu0 0.0
    %v1084 = vand.u32 %v49, 4294901760
    %v1085 = vsub.f32 %v49, %v1084
    %v1086 = vand.u32 %v1085, 4294901760
    %v1087 = vsub.f32 %v1085, %v1086
    %v1088 = vand.u32 %v1087, 4294901760
    %1089 = vmatpush1.msra.mxu0 %v1088
    %1090 = vmatprep.subr.mxu0 0.0
    %v1091 = vand.u32 %v50, 4294901760
    %v1092 = vsub.f32 %v50, %v1091
    %v1093 = vand.u32 %v1092, 4294901760
    %v1094 = vsub.f32 %v1092, %v1093
    %v1095 = vand.u32 %v1094, 4294901760
    %1096 = vmatpush1.msra.mxu0 %v1095
    %1097 = vmatprep.subr.mxu0 0.0
    %v1098 = vand.u32 %v51, 4294901760
    %v1099 = vsub.f32 %v51, %v1098
    %v1100 = vand.u32 %v1099, 4294901760
    %v1101 = vsub.f32 %v1099, %v1100
    %v1102 = vand.u32 %v1101, 4294901760
    %1103 = vmatpush1.msra.mxu0 %v1102
    %1104 = vmatprep.subr.mxu0 0.0
    %v1105 = vand.u32 %v52, 4294901760
    %v1106 = vsub.f32 %v52, %v1105
    %v1107 = vand.u32 %v1106, 4294901760
    %v1108 = vsub.f32 %v1106, %v1107
    %v1109 = vand.u32 %v1108, 4294901760
    %1110 = vmatpush1.msra.mxu0 %v1109
    %1111 = vmatprep.subr.mxu0 0.0
    %v1112 = vand.u32 %v53, 4294901760
    %v1113 = vsub.f32 %v53, %v1112
    %v1114 = vand.u32 %v1113, 4294901760
    %v1115 = vsub.f32 %v1113, %v1114
    %v1116 = vand.u32 %v1115, 4294901760
    %1117 = vmatpush1.msra.mxu0 %v1116
    %1118 = vmatprep.subr.mxu0 0.0
    %v1119 = vand.u32 %v54, 4294901760
    %v1120 = vsub.f32 %v54, %v1119
    %v1121 = vand.u32 %v1120, 4294901760
    %v1122 = vsub.f32 %v1120, %v1121
    %v1123 = vand.u32 %v1122, 4294901760
    %1124 = vmatpush1.msra.mxu0 %v1123
    %1125 = vmatprep.subr.mxu0 0.0
    %v1126 = vand.u32 %v55, 4294901760
    %v1127 = vsub.f32 %v55, %v1126
    %v1128 = vand.u32 %v1127, 4294901760
    %v1129 = vsub.f32 %v1127, %v1128
    %v1130 = vand.u32 %v1129, 4294901760
    %1131 = vmatpush1.msra.mxu0 %v1130
    %1132 = vmatprep.subr.mxu0 0.0
    %v1133 = vand.u32 %v56, 4294901760
    %v1134 = vsub.f32 %v56, %v1133
    %v1135 = vand.u32 %v1134, 4294901760
    %v1136 = vsub.f32 %v1134, %v1135
    %v1137 = vand.u32 %v1136, 4294901760
    %1138 = vmatpush1.msra.mxu0 %v1137
    %1139 = vmatprep.subr.mxu0 0.0
    %v1140 = vand.u32 %v57, 4294901760
    %v1141 = vsub.f32 %v57, %v1140
    %v1142 = vand.u32 %v1141, 4294901760
    %v1143 = vsub.f32 %v1141, %v1142
    %v1144 = vand.u32 %v1143, 4294901760
    %1145 = vmatpush1.msra.mxu0 %v1144
    %1146 = vmatprep.subr.mxu0 0.0
    %v1147 = vand.u32 %v58, 4294901760
    %v1148 = vsub.f32 %v58, %v1147
    %v1149 = vand.u32 %v1148, 4294901760
    %v1150 = vsub.f32 %v1148, %v1149
    %v1151 = vand.u32 %v1150, 4294901760
    %1152 = vmatpush1.msra.mxu0 %v1151
    %1153 = vmatprep.subr.mxu0 0.0
    %v1154 = vand.u32 %v59, 4294901760
    %v1155 = vsub.f32 %v59, %v1154
    %v1156 = vand.u32 %v1155, 4294901760
    %v1157 = vsub.f32 %v1155, %v1156
    %v1158 = vand.u32 %v1157, 4294901760
    %1159 = vmatpush1.msra.mxu0 %v1158
    %1160 = vmatprep.subr.mxu0 0.0
    %v1161 = vand.u32 %v60, 4294901760
    %v1162 = vsub.f32 %v60, %v1161
    %v1163 = vand.u32 %v1162, 4294901760
    %v1164 = vsub.f32 %v1162, %v1163
    %v1165 = vand.u32 %v1164, 4294901760
    %1166 = vmatpush1.msra.mxu0 %v1165
    %1167 = vmatprep.subr.mxu0 0.0
    %v1168 = vand.u32 %v61, 4294901760
    %v1169 = vsub.f32 %v61, %v1168
    %v1170 = vand.u32 %v1169, 4294901760
    %v1171 = vsub.f32 %v1169, %v1170
    %v1172 = vand.u32 %v1171, 4294901760
    %1173 = vmatpush1.msra.mxu0 %v1172
    %1174 = vmatprep.subr.mxu0 0.0
    %v1175 = vand.u32 %v62, 4294901760
    %v1176 = vsub.f32 %v62, %v1175
    %v1177 = vand.u32 %v1176, 4294901760
    %v1178 = vsub.f32 %v1176, %v1177
    %v1179 = vand.u32 %v1178, 4294901760
    %1180 = vmatpush1.msra.mxu0 %v1179
    %1181 = vmatprep.subr.mxu0 0.0
    %v1182 = vand.u32 %v63, 4294901760
    %v1183 = vsub.f32 %v63, %v1182
    %v1184 = vand.u32 %v1183, 4294901760
    %v1185 = vsub.f32 %v1183, %v1184
    %v1186 = vand.u32 %v1185, 4294901760
    %1187 = vmatpush1.msra.mxu0 %v1186
    %1188 = vmatprep.subr.mxu0 0.0
    %v1189 = vand.u32 %v64, 4294901760
    %v1190 = vsub.f32 %v64, %v1189
    %v1191 = vand.u32 %v1190, 4294901760
    %v1192 = vsub.f32 %v1190, %v1191
    %v1193 = vand.u32 %v1192, 4294901760
    %1194 = vmatpush1.msra.mxu0 %v1193
    %1195 = vmatprep.subr.mxu0 0.0
    %v1196 = vand.u32 %v65, 4294901760
    %v1197 = vsub.f32 %v65, %v1196
    %v1198 = vand.u32 %v1197, 4294901760
    %v1199 = vsub.f32 %v1197, %v1198
    %v1200 = vand.u32 %v1199, 4294901760
    %1201 = vmatpush1.msra.mxu0 %v1200
    %1202 = vmatprep.subr.mxu0 0.0
    %v1203 = vand.u32 %v66, 4294901760
    %v1204 = vsub.f32 %v66, %v1203
    %v1205 = vand.u32 %v1204, 4294901760
    %v1206 = vsub.f32 %v1204, %v1205
    %v1207 = vand.u32 %v1206, 4294901760
    %1208 = vmatpush1.msra.mxu0 %v1207
    %1209 = vmatprep.subr.mxu0 0.0
    %v1210 = vand.u32 %v67, 4294901760
    %v1211 = vsub.f32 %v67, %v1210
    %v1212 = vand.u32 %v1211, 4294901760
    %v1213 = vsub.f32 %v1211, %v1212
    %v1214 = vand.u32 %v1213, 4294901760
    %1215 = vmatpush1.msra.mxu0 %v1214
    %1216 = vmatprep.subr.mxu0 0.0
    %v1217 = vand.u32 %v68, 4294901760
    %v1218 = vsub.f32 %v68, %v1217
    %v1219 = vand.u32 %v1218, 4294901760
    %v1220 = vsub.f32 %v1218, %v1219
    %v1221 = vand.u32 %v1220, 4294901760
    %1222 = vmatpush1.msra.mxu0 %v1221
    %1223 = vmatprep.subr.mxu0 0.0
    %v1224 = vand.u32 %v69, 4294901760
    %v1225 = vsub.f32 %v69, %v1224
    %v1226 = vand.u32 %v1225, 4294901760
    %v1227 = vsub.f32 %v1225, %v1226
    %v1228 = vand.u32 %v1227, 4294901760
    %1229 = vmatpush1.msra.mxu0 %v1228
    %1230 = vmatprep.subr.mxu0 0.0
    %v1231 = vand.u32 %v70, 4294901760
    %v1232 = vsub.f32 %v70, %v1231
    %v1233 = vand.u32 %v1232, 4294901760
    %v1234 = vsub.f32 %v1232, %v1233
    %v1235 = vand.u32 %v1234, 4294901760
    %1236 = vmatpush1.msra.mxu0 %v1235
    %1237 = vmatprep.subr.mxu0 0.0
    %v1238 = vand.u32 %v71, 4294901760
    %v1239 = vsub.f32 %v71, %v1238
    %v1240 = vand.u32 %v1239, 4294901760
    %v1241 = vsub.f32 %v1239, %v1240
    %v1242 = vand.u32 %v1241, 4294901760
    %1243 = vmatpush1.msra.mxu0 %v1242
    %1244 = vmatprep.subr.mxu0 0.0
    %v1245 = vand.u32 %v72, 4294901760
    %v1246 = vsub.f32 %v72, %v1245
    %v1247 = vand.u32 %v1246, 4294901760
    %v1248 = vsub.f32 %v1246, %v1247
    %v1249 = vand.u32 %v1248, 4294901760
    %1250 = vmatpush1.msra.mxu0 %v1249
    %1251 = vmatprep.subr.mxu0 0.0
    %v1252 = vand.u32 %v73, 4294901760
    %v1253 = vsub.f32 %v73, %v1252
    %v1254 = vand.u32 %v1253, 4294901760
    %v1255 = vsub.f32 %v1253, %v1254
    %v1256 = vand.u32 %v1255, 4294901760
    %1257 = vmatpush1.msra.mxu0 %v1256
    %1258 = vmatprep.subr.mxu0 0.0
    %v1259 = vand.u32 %v74, 4294901760
    %v1260 = vsub.f32 %v74, %v1259
    %v1261 = vand.u32 %v1260, 4294901760
    %v1262 = vsub.f32 %v1260, %v1261
    %v1263 = vand.u32 %v1262, 4294901760
    %1264 = vmatpush1.msra.mxu0 %v1263
    %1265 = vmatprep.subr.mxu0 0.0
    %v1266 = vand.u32 %v75, 4294901760
    %v1267 = vsub.f32 %v75, %v1266
    %v1268 = vand.u32 %v1267, 4294901760
    %v1269 = vsub.f32 %v1267, %v1268
    %v1270 = vand.u32 %v1269, 4294901760
    %1271 = vmatpush1.msra.mxu0 %v1270
    %1272 = vmatprep.subr.mxu0 0.0
    %v1273 = vand.u32 %v76, 4294901760
    %v1274 = vsub.f32 %v76, %v1273
    %v1275 = vand.u32 %v1274, 4294901760
    %v1276 = vsub.f32 %v1274, %v1275
    %v1277 = vand.u32 %v1276, 4294901760
    %1278 = vmatpush1.msra.mxu0 %v1277
    %1279 = vmatprep.subr.mxu0 0.0
    %v1280 = vand.u32 %v77, 4294901760
    %v1281 = vsub.f32 %v77, %v1280
    %v1282 = vand.u32 %v1281, 4294901760
    %v1283 = vsub.f32 %v1281, %v1282
    %v1284 = vand.u32 %v1283, 4294901760
    %1285 = vmatpush1.msra.mxu0 %v1284
    %1286 = vmatprep.subr.mxu0 0.0
    %v1287 = vand.u32 %v78, 4294901760
    %v1288 = vsub.f32 %v78, %v1287
    %v1289 = vand.u32 %v1288, 4294901760
    %v1290 = vsub.f32 %v1288, %v1289
    %v1291 = vand.u32 %v1290, 4294901760
    %1292 = vmatpush1.msra.mxu0 %v1291
    %1293 = vmatprep.subr.mxu0 0.0
    %v1294 = vand.u32 %v79, 4294901760
    %v1295 = vsub.f32 %v79, %v1294
    %v1296 = vand.u32 %v1295, 4294901760
    %v1297 = vsub.f32 %v1295, %v1296
    %v1298 = vand.u32 %v1297, 4294901760
    %1299 = vmatpush1.msra.mxu0 %v1298
    %v1300 = vand.u32 %v97, 4294901760
    %1301 = vmatprep.mubr.f32.mxu0 %v1300
    %v1302 = vand.u32 %v95, 4294901760
    %1303 = vmatmul.mubr.f32.gmra.mrb[0].mxu0 %v1302
    %v1304 = vpop.f32.mrb[0].mxu0
    %v1305 = vadd.f32 %v1073, %v1304
    %v1306 = vpop.f32.mrb[0].mxu0
    %1307 = vdwg.mxu0
    %1308 = vmatprep.subr.mxu0 0.0
    %v1309 = vand.u32 %v48, 4294901760
    %v1310 = vsub.f32 %v48, %v1309
    %1311 = vmatpush1.msra.mxu0 %v1310
    %1312 = vmatprep.subr.mxu0 0.0
    %v1313 = vand.u32 %v49, 4294901760
    %v1314 = vsub.f32 %v49, %v1313
    %1315 = vmatpush1.msra.mxu0 %v1314
    %1316 = vmatprep.subr.mxu0 0.0
    %v1317 = vand.u32 %v50, 4294901760
    %v1318 = vsub.f32 %v50, %v1317
    %1319 = vmatpush1.msra.mxu0 %v1318
    %1320 = vmatprep.subr.mxu0 0.0
    %v1321 = vand.u32 %v51, 4294901760
    %v1322 = vsub.f32 %v51, %v1321
    %1323 = vmatpush1.msra.mxu0 %v1322
    %1324 = vmatprep.subr.mxu0 0.0
    %v1325 = vand.u32 %v52, 4294901760
    %v1326 = vsub.f32 %v52, %v1325
    %1327 = vmatpush1.msra.mxu0 %v1326
    %1328 = vmatprep.subr.mxu0 0.0
    %v1329 = vand.u32 %v53, 4294901760
    %v1330 = vsub.f32 %v53, %v1329
    %1331 = vmatpush1.msra.mxu0 %v1330
    %1332 = vmatprep.subr.mxu0 0.0
    %v1333 = vand.u32 %v54, 4294901760
    %v1334 = vsub.f32 %v54, %v1333
    %1335 = vmatpush1.msra.mxu0 %v1334
    %1336 = vmatprep.subr.mxu0 0.0
    %v1337 = vand.u32 %v55, 4294901760
    %v1338 = vsub.f32 %v55, %v1337
    %1339 = vmatpush1.msra.mxu0 %v1338
    %1340 = vmatprep.subr.mxu0 0.0
    %v1341 = vand.u32 %v56, 4294901760
    %v1342 = vsub.f32 %v56, %v1341
    %1343 = vmatpush1.msra.mxu0 %v1342
    %1344 = vmatprep.subr.mxu0 0.0
    %v1345 = vand.u32 %v57, 4294901760
    %v1346 = vsub.f32 %v57, %v1345
    %1347 = vmatpush1.msra.mxu0 %v1346
    %1348 = vmatprep.subr.mxu0 0.0
    %v1349 = vand.u32 %v58, 4294901760
    %v1350 = vsub.f32 %v58, %v1349
    %1351 = vmatpush1.msra.mxu0 %v1350
    %1352 = vmatprep.subr.mxu0 0.0
    %v1353 = vand.u32 %v59, 4294901760
    %v1354 = vsub.f32 %v59, %v1353
    %1355 = vmatpush1.msra.mxu0 %v1354
    %1356 = vmatprep.subr.mxu0 0.0
    %v1357 = vand.u32 %v60, 4294901760
    %v1358 = vsub.f32 %v60, %v1357
    %1359 = vmatpush1.msra.mxu0 %v1358
    %1360 = vmatprep.subr.mxu0 0.0
    %v1361 = vand.u32 %v61, 4294901760
    %v1362 = vsub.f32 %v61, %v1361
    %1363 = vmatpush1.msra.mxu0 %v1362
    %1364 = vmatprep.subr.mxu0 0.0
    %v1365 = vand.u32 %v62, 4294901760
    %v1366 = vsub.f32 %v62, %v1365
    %1367 = vmatpush1.msra.mxu0 %v1366
    %1368 = vmatprep.subr.mxu0 0.0
    %v1369 = vand.u32 %v63, 4294901760
    %v1370 = vsub.f32 %v63, %v1369
    %1371 = vmatpush1.msra.mxu0 %v1370
    %1372 = vmatprep.subr.mxu0 0.0
    %v1373 = vand.u32 %v64, 4294901760
    %v1374 = vsub.f32 %v64, %v1373
    %1375 = vmatpush1.msra.mxu0 %v1374
    %1376 = vmatprep.subr.mxu0 0.0
    %v1377 = vand.u32 %v65, 4294901760
    %v1378 = vsub.f32 %v65, %v1377
    %1379 = vmatpush1.msra.mxu0 %v1378
    %1380 = vmatprep.subr.mxu0 0.0
    %v1381 = vand.u32 %v66, 4294901760
    %v1382 = vsub.f32 %v66, %v1381
    %1383 = vmatpush1.msra.mxu0 %v1382
    %1384 = vmatprep.subr.mxu0 0.0
    %v1385 = vand.u32 %v67, 4294901760
    %v1386 = vsub.f32 %v67, %v1385
    %1387 = vmatpush1.msra.mxu0 %v1386
    %1388 = vmatprep.subr.mxu0 0.0
    %v1389 = vand.u32 %v68, 4294901760
    %v1390 = vsub.f32 %v68, %v1389
    %1391 = vmatpush1.msra.mxu0 %v1390
    %1392 = vmatprep.subr.mxu0 0.0
    %v1393 = vand.u32 %v69, 4294901760
    %v1394 = vsub.f32 %v69, %v1393
    %1395 = vmatpush1.msra.mxu0 %v1394
    %1396 = vmatprep.subr.mxu0 0.0
    %v1397 = vand.u32 %v70, 4294901760
    %v1398 = vsub.f32 %v70, %v1397
    %1399 = vmatpush1.msra.mxu0 %v1398
    %1400 = vmatprep.subr.mxu0 0.0
    %v1401 = vand.u32 %v71, 4294901760
    %v1402 = vsub.f32 %v71, %v1401
    %1403 = vmatpush1.msra.mxu0 %v1402
    %1404 = vmatprep.subr.mxu0 0.0
    %v1405 = vand.u32 %v72, 4294901760
    %v1406 = vsub.f32 %v72, %v1405
    %1407 = vmatpush1.msra.mxu0 %v1406
    %1408 = vmatprep.subr.mxu0 0.0
    %v1409 = vand.u32 %v73, 4294901760
    %v1410 = vsub.f32 %v73, %v1409
    %1411 = vmatpush1.msra.mxu0 %v1410
    %1412 = vmatprep.subr.mxu0 0.0
    %v1413 = vand.u32 %v74, 4294901760
    %v1414 = vsub.f32 %v74, %v1413
    %1415 = vmatpush1.msra.mxu0 %v1414
    %1416 = vmatprep.subr.mxu0 0.0
    %v1417 = vand.u32 %v75, 4294901760
    %v1418 = vsub.f32 %v75, %v1417
    %1419 = vmatpush1.msra.mxu0 %v1418
    %1420 = vmatprep.subr.mxu0 0.0
    %v1421 = vand.u32 %v76, 4294901760
    %v1422 = vsub.f32 %v76, %v1421
    %1423 = vmatpush1.msra.mxu0 %v1422
    %1424 = vmatprep.subr.mxu0 0.0
    %v1425 = vand.u32 %v77, 4294901760
    %v1426 = vsub.f32 %v77, %v1425
    %1427 = vmatpush1.msra.mxu0 %v1426
    %1428 = vmatprep.subr.mxu0 0.0
    %v1429 = vand.u32 %v78, 4294901760
    %v1430 = vsub.f32 %v78, %v1429
    %1431 = vmatpush1.msra.mxu0 %v1430
    %1432 = vmatprep.subr.mxu0 0.0
    %v1433 = vand.u32 %v79, 4294901760
    %v1434 = vsub.f32 %v79, %v1433
    %1435 = vmatpush1.msra.mxu0 %v1434
    %v1436 = vand.u32 %v97, 4294901760
    %v1437 = vsub.f32 %v97, %v1436
    %1438 = vmatprep.mubr.f32.mxu0 %v1437
    %v1439 = vand.u32 %v95, 4294901760
    %v1440 = vsub.f32 %v95, %v1439
    %1441 = vmatmul.mubr.f32.gmra.mrb[0].mxu0 %v1440
    %v1442 = vpop.f32.mrb[0].mxu0
    %v1443 = vadd.f32 %v1305, %v1442
    %v1444 = vpop.f32.mrb[0].mxu0
    %1445 = vdwg.mxu0
    %1446 = vmatprep.subr.mxu0 0.0
    %v1447 = vand.u32 %v48, 4294901760
    %1448 = vmatpush1.msra.mxu0 %v1447
    %1449 = vmatprep.subr.mxu0 0.0
    %v1450 = vand.u32 %v49, 4294901760
    %1451 = vmatpush1.msra.mxu0 %v1450
    %1452 = vmatprep.subr.mxu0 0.0
    %v1453 = vand.u32 %v50, 4294901760
    %1454 = vmatpush1.msra.mxu0 %v1453
    %1455 = vmatprep.subr.mxu0 0.0
    %v1456 = vand.u32 %v51, 4294901760
    %1457 = vmatpush1.msra.mxu0 %v1456
    %1458 = vmatprep.subr.mxu0 0.0
    %v1459 = vand.u32 %v52, 4294901760
    %1460 = vmatpush1.msra.mxu0 %v1459
    %1461 = vmatprep.subr.mxu0 0.0
    %v1462 = vand.u32 %v53, 4294901760
    %1463 = vmatpush1.msra.mxu0 %v1462
    %1464 = vmatprep.subr.mxu0 0.0
    %v1465 = vand.u32 %v54, 4294901760
    %1466 = vmatpush1.msra.mxu0 %v1465
    %1467 = vmatprep.subr.mxu0 0.0
    %v1468 = vand.u32 %v55, 4294901760
    %1469 = vmatpush1.msra.mxu0 %v1468
    %1470 = vmatprep.subr.mxu0 0.0
    %v1471 = vand.u32 %v56, 4294901760
    %1472 = vmatpush1.msra.mxu0 %v1471
    %1473 = vmatprep.subr.mxu0 0.0
    %v1474 = vand.u32 %v57, 4294901760
    %1475 = vmatpush1.msra.mxu0 %v1474
    %1476 = vmatprep.subr.mxu0 0.0
    %v1477 = vand.u32 %v58, 4294901760
    %1478 = vmatpush1.msra.mxu0 %v1477
    %1479 = vmatprep.subr.mxu0 0.0
    %v1480 = vand.u32 %v59, 4294901760
    %1481 = vmatpush1.msra.mxu0 %v1480
    %1482 = vmatprep.subr.mxu0 0.0
    %v1483 = vand.u32 %v60, 4294901760
    %1484 = vmatpush1.msra.mxu0 %v1483
    %1485 = vmatprep.subr.mxu0 0.0
    %v1486 = vand.u32 %v61, 4294901760
    %1487 = vmatpush1.msra.mxu0 %v1486
    %1488 = vmatprep.subr.mxu0 0.0
    %v1489 = vand.u32 %v62, 4294901760
    %1490 = vmatpush1.msra.mxu0 %v1489
    %1491 = vmatprep.subr.mxu0 0.0
    %v1492 = vand.u32 %v63, 4294901760
    %1493 = vmatpush1.msra.mxu0 %v1492
    %1494 = vmatprep.subr.mxu0 0.0
    %v1495 = vand.u32 %v64, 4294901760
    %1496 = vmatpush1.msra.mxu0 %v1495
    %1497 = vmatprep.subr.mxu0 0.0
    %v1498 = vand.u32 %v65, 4294901760
    %1499 = vmatpush1.msra.mxu0 %v1498
    %1500 = vmatprep.subr.mxu0 0.0
    %v1501 = vand.u32 %v66, 4294901760
    %1502 = vmatpush1.msra.mxu0 %v1501
    %1503 = vmatprep.subr.mxu0 0.0
    %v1504 = vand.u32 %v67, 4294901760
    %1505 = vmatpush1.msra.mxu0 %v1504
    %1506 = vmatprep.subr.mxu0 0.0
    %v1507 = vand.u32 %v68, 4294901760
    %1508 = vmatpush1.msra.mxu0 %v1507
    %1509 = vmatprep.subr.mxu0 0.0
    %v1510 = vand.u32 %v69, 4294901760
    %1511 = vmatpush1.msra.mxu0 %v1510
    %1512 = vmatprep.subr.mxu0 0.0
    %v1513 = vand.u32 %v70, 4294901760
    %1514 = vmatpush1.msra.mxu0 %v1513
    %1515 = vmatprep.subr.mxu0 0.0
    %v1516 = vand.u32 %v71, 4294901760
    %1517 = vmatpush1.msra.mxu0 %v1516
    %1518 = vmatprep.subr.mxu0 0.0
    %v1519 = vand.u32 %v72, 4294901760
    %1520 = vmatpush1.msra.mxu0 %v1519
    %1521 = vmatprep.subr.mxu0 0.0
    %v1522 = vand.u32 %v73, 4294901760
    %1523 = vmatpush1.msra.mxu0 %v1522
    %1524 = vmatprep.subr.mxu0 0.0
    %v1525 = vand.u32 %v74, 4294901760
    %1526 = vmatpush1.msra.mxu0 %v1525
    %1527 = vmatprep.subr.mxu0 0.0
    %v1528 = vand.u32 %v75, 4294901760
    %1529 = vmatpush1.msra.mxu0 %v1528
    %1530 = vmatprep.subr.mxu0 0.0
    %v1531 = vand.u32 %v76, 4294901760
    %1532 = vmatpush1.msra.mxu0 %v1531
    %1533 = vmatprep.subr.mxu0 0.0
    %v1534 = vand.u32 %v77, 4294901760
    %1535 = vmatpush1.msra.mxu0 %v1534
    %1536 = vmatprep.subr.mxu0 0.0
    %v1537 = vand.u32 %v78, 4294901760
    %1538 = vmatpush1.msra.mxu0 %v1537
    %1539 = vmatprep.subr.mxu0 0.0
    %v1540 = vand.u32 %v79, 4294901760
    %1541 = vmatpush1.msra.mxu0 %v1540
    %v1542 = vand.u32 %v97, 4294901760
    %v1543 = vsub.f32 %v97, %v1542
    %v1544 = vand.u32 %v1543, 4294901760
    %1545 = vmatprep.mubr.f32.mxu0 %v1544
    %v1546 = vand.u32 %v95, 4294901760
    %v1547 = vsub.f32 %v95, %v1546
    %v1548 = vand.u32 %v1547, 4294901760
    %1549 = vmatmul.mubr.f32.gmra.mrb[0].mxu0 %v1548
    %v1550 = vpop.f32.mrb[0].mxu0
    %v1551 = vadd.f32 %v1443, %v1550
    %v1552 = vpop.f32.mrb[0].mxu0
    %1553 = vdwg.mxu0
    %1554 = vmatprep.subr.mxu0 0.0
    %v1555 = vand.u32 %v48, 4294901760
    %v1556 = vsub.f32 %v48, %v1555
    %v1557 = vand.u32 %v1556, 4294901760
    %1558 = vmatpush1.msra.mxu0 %v1557
    %1559 = vmatprep.subr.mxu0 0.0
    %v1560 = vand.u32 %v49, 4294901760
    %v1561 = vsub.f32 %v49, %v1560
    %v1562 = vand.u32 %v1561, 4294901760
    %1563 = vmatpush1.msra.mxu0 %v1562
    %1564 = vmatprep.subr.mxu0 0.0
    %v1565 = vand.u32 %v50, 4294901760
    %v1566 = vsub.f32 %v50, %v1565
    %v1567 = vand.u32 %v1566, 4294901760
    %1568 = vmatpush1.msra.mxu0 %v1567
    %1569 = vmatprep.subr.mxu0 0.0
    %v1570 = vand.u32 %v51, 4294901760
    %v1571 = vsub.f32 %v51, %v1570
    %v1572 = vand.u32 %v1571, 4294901760
    %1573 = vmatpush1.msra.mxu0 %v1572
    %1574 = vmatprep.subr.mxu0 0.0
    %v1575 = vand.u32 %v52, 4294901760
    %v1576 = vsub.f32 %v52, %v1575
    %v1577 = vand.u32 %v1576, 4294901760
    %1578 = vmatpush1.msra.mxu0 %v1577
    %1579 = vmatprep.subr.mxu0 0.0
    %v1580 = vand.u32 %v53, 4294901760
    %v1581 = vsub.f32 %v53, %v1580
    %v1582 = vand.u32 %v1581, 4294901760
    %1583 = vmatpush1.msra.mxu0 %v1582
    %1584 = vmatprep.subr.mxu0 0.0
    %v1585 = vand.u32 %v54, 4294901760
    %v1586 = vsub.f32 %v54, %v1585
    %v1587 = vand.u32 %v1586, 4294901760
    %1588 = vmatpush1.msra.mxu0 %v1587
    %1589 = vmatprep.subr.mxu0 0.0
    %v1590 = vand.u32 %v55, 4294901760
    %v1591 = vsub.f32 %v55, %v1590
    %v1592 = vand.u32 %v1591, 4294901760
    %1593 = vmatpush1.msra.mxu0 %v1592
    %1594 = vmatprep.subr.mxu0 0.0
    %v1595 = vand.u32 %v56, 4294901760
    %v1596 = vsub.f32 %v56, %v1595
    %v1597 = vand.u32 %v1596, 4294901760
    %1598 = vmatpush1.msra.mxu0 %v1597
    %1599 = vmatprep.subr.mxu0 0.0
    %v1600 = vand.u32 %v57, 4294901760
    %v1601 = vsub.f32 %v57, %v1600
    %v1602 = vand.u32 %v1601, 4294901760
    %1603 = vmatpush1.msra.mxu0 %v1602
    %1604 = vmatprep.subr.mxu0 0.0
    %v1605 = vand.u32 %v58, 4294901760
    %v1606 = vsub.f32 %v58, %v1605
    %v1607 = vand.u32 %v1606, 4294901760
    %1608 = vmatpush1.msra.mxu0 %v1607
    %1609 = vmatprep.subr.mxu0 0.0
    %v1610 = vand.u32 %v59, 4294901760
    %v1611 = vsub.f32 %v59, %v1610
    %v1612 = vand.u32 %v1611, 4294901760
    %1613 = vmatpush1.msra.mxu0 %v1612
    %1614 = vmatprep.subr.mxu0 0.0
    %v1615 = vand.u32 %v60, 4294901760
    %v1616 = vsub.f32 %v60, %v1615
    %v1617 = vand.u32 %v1616, 4294901760
    %1618 = vmatpush1.msra.mxu0 %v1617
    %1619 = vmatprep.subr.mxu0 0.0
    %v1620 = vand.u32 %v61, 4294901760
    %v1621 = vsub.f32 %v61, %v1620
    %v1622 = vand.u32 %v1621, 4294901760
    %1623 = vmatpush1.msra.mxu0 %v1622
    %1624 = vmatprep.subr.mxu0 0.0
    %v1625 = vand.u32 %v62, 4294901760
    %v1626 = vsub.f32 %v62, %v1625
    %v1627 = vand.u32 %v1626, 4294901760
    %1628 = vmatpush1.msra.mxu0 %v1627
    %1629 = vmatprep.subr.mxu0 0.0
    %v1630 = vand.u32 %v63, 4294901760
    %v1631 = vsub.f32 %v63, %v1630
    %v1632 = vand.u32 %v1631, 4294901760
    %1633 = vmatpush1.msra.mxu0 %v1632
    %1634 = vmatprep.subr.mxu0 0.0
    %v1635 = vand.u32 %v64, 4294901760
    %v1636 = vsub.f32 %v64, %v1635
    %v1637 = vand.u32 %v1636, 4294901760
    %1638 = vmatpush1.msra.mxu0 %v1637
    %1639 = vmatprep.subr.mxu0 0.0
    %v1640 = vand.u32 %v65, 4294901760
    %v1641 = vsub.f32 %v65, %v1640
    %v1642 = vand.u32 %v1641, 4294901760
    %1643 = vmatpush1.msra.mxu0 %v1642
    %1644 = vmatprep.subr.mxu0 0.0
    %v1645 = vand.u32 %v66, 4294901760
    %v1646 = vsub.f32 %v66, %v1645
    %v1647 = vand.u32 %v1646, 4294901760
    %1648 = vmatpush1.msra.mxu0 %v1647
    %1649 = vmatprep.subr.mxu0 0.0
    %v1650 = vand.u32 %v67, 4294901760
    %v1651 = vsub.f32 %v67, %v1650
    %v1652 = vand.u32 %v1651, 4294901760
    %1653 = vmatpush1.msra.mxu0 %v1652
    %1654 = vmatprep.subr.mxu0 0.0
    %v1655 = vand.u32 %v68, 4294901760
    %v1656 = vsub.f32 %v68, %v1655
    %v1657 = vand.u32 %v1656, 4294901760
    %1658 = vmatpush1.msra.mxu0 %v1657
    %1659 = vmatprep.subr.mxu0 0.0
    %v1660 = vand.u32 %v69, 4294901760
    %v1661 = vsub.f32 %v69, %v1660
    %v1662 = vand.u32 %v1661, 4294901760
    %1663 = vmatpush1.msra.mxu0 %v1662
    %1664 = vmatprep.subr.mxu0 0.0
    %v1665 = vand.u32 %v70, 4294901760
    %v1666 = vsub.f32 %v70, %v1665
    %v1667 = vand.u32 %v1666, 4294901760
    %1668 = vmatpush1.msra.mxu0 %v1667
    %1669 = vmatprep.subr.mxu0 0.0
    %v1670 = vand.u32 %v71, 4294901760
    %v1671 = vsub.f32 %v71, %v1670
    %v1672 = vand.u32 %v1671, 4294901760
    %1673 = vmatpush1.msra.mxu0 %v1672
    %1674 = vmatprep.subr.mxu0 0.0
    %v1675 = vand.u32 %v72, 4294901760
    %v1676 = vsub.f32 %v72, %v1675
    %v1677 = vand.u32 %v1676, 4294901760
    %1678 = vmatpush1.msra.mxu0 %v1677
    %1679 = vmatprep.subr.mxu0 0.0
    %v1680 = vand.u32 %v73, 4294901760
    %v1681 = vsub.f32 %v73, %v1680
    %v1682 = vand.u32 %v1681, 4294901760
    %1683 = vmatpush1.msra.mxu0 %v1682
    %1684 = vmatprep.subr.mxu0 0.0
    %v1685 = vand.u32 %v74, 4294901760
    %v1686 = vsub.f32 %v74, %v1685
    %v1687 = vand.u32 %v1686, 4294901760
    %1688 = vmatpush1.msra.mxu0 %v1687
    %1689 = vmatprep.subr.mxu0 0.0
    %v1690 = vand.u32 %v75, 4294901760
    %v1691 = vsub.f32 %v75, %v1690
    %v1692 = vand.u32 %v1691, 4294901760
    %1693 = vmatpush1.msra.mxu0 %v1692
    %1694 = vmatprep.subr.mxu0 0.0
    %v1695 = vand.u32 %v76, 4294901760
    %v1696 = vsub.f32 %v76, %v1695
    %v1697 = vand.u32 %v1696, 4294901760
    %1698 = vmatpush1.msra.mxu0 %v1697
    %1699 = vmatprep.subr.mxu0 0.0
    %v1700 = vand.u32 %v77, 4294901760
    %v1701 = vsub.f32 %v77, %v1700
    %v1702 = vand.u32 %v1701, 4294901760
    %1703 = vmatpush1.msra.mxu0 %v1702
    %1704 = vmatprep.subr.mxu0 0.0
    %v1705 = vand.u32 %v78, 4294901760
    %v1706 = vsub.f32 %v78, %v1705
    %v1707 = vand.u32 %v1706, 4294901760
    %1708 = vmatpush1.msra.mxu0 %v1707
    %1709 = vmatprep.subr.mxu0 0.0
    %v1710 = vand.u32 %v79, 4294901760
    %v1711 = vsub.f32 %v79, %v1710
    %v1712 = vand.u32 %v1711, 4294901760
    %1713 = vmatpush1.msra.mxu0 %v1712
    %v1714 = vand.u32 %v97, 4294901760
    %1715 = vmatprep.mubr.f32.mxu0 %v1714
    %v1716 = vand.u32 %v95, 4294901760
    %1717 = vmatmul.mubr.f32.gmra.mrb[0].mxu0 %v1716
    %v1718 = vpop.f32.mrb[0].mxu0
    %v1719 = vadd.f32 %v1551, %v1718
    %v1720 = vpop.f32.mrb[0].mxu0
    %1721 = vdwg.mxu0
    %1722 = vmatprep.subr.mxu0 0.0
    %v1723 = vand.u32 %v48, 4294901760
    %1724 = vmatpush1.msra.mxu0 %v1723
    %1725 = vmatprep.subr.mxu0 0.0
    %v1726 = vand.u32 %v49, 4294901760
    %1727 = vmatpush1.msra.mxu0 %v1726
    %1728 = vmatprep.subr.mxu0 0.0
    %v1729 = vand.u32 %v50, 4294901760
    %1730 = vmatpush1.msra.mxu0 %v1729
    %1731 = vmatprep.subr.mxu0 0.0
    %v1732 = vand.u32 %v51, 4294901760
    %1733 = vmatpush1.msra.mxu0 %v1732
    %1734 = vmatprep.subr.mxu0 0.0
    %v1735 = vand.u32 %v52, 4294901760
    %1736 = vmatpush1.msra.mxu0 %v1735
    %1737 = vmatprep.subr.mxu0 0.0
    %v1738 = vand.u32 %v53, 4294901760
    %1739 = vmatpush1.msra.mxu0 %v1738
    %1740 = vmatprep.subr.mxu0 0.0
    %v1741 = vand.u32 %v54, 4294901760
    %1742 = vmatpush1.msra.mxu0 %v1741
    %1743 = vmatprep.subr.mxu0 0.0
    %v1744 = vand.u32 %v55, 4294901760
    %1745 = vmatpush1.msra.mxu0 %v1744
    %1746 = vmatprep.subr.mxu0 0.0
    %v1747 = vand.u32 %v56, 4294901760
    %1748 = vmatpush1.msra.mxu0 %v1747
    %1749 = vmatprep.subr.mxu0 0.0
    %v1750 = vand.u32 %v57, 4294901760
    %1751 = vmatpush1.msra.mxu0 %v1750
    %1752 = vmatprep.subr.mxu0 0.0
    %v1753 = vand.u32 %v58, 4294901760
    %1754 = vmatpush1.msra.mxu0 %v1753
    %1755 = vmatprep.subr.mxu0 0.0
    %v1756 = vand.u32 %v59, 4294901760
    %1757 = vmatpush1.msra.mxu0 %v1756
    %1758 = vmatprep.subr.mxu0 0.0
    %v1759 = vand.u32 %v60, 4294901760
    %1760 = vmatpush1.msra.mxu0 %v1759
    %1761 = vmatprep.subr.mxu0 0.0
    %v1762 = vand.u32 %v61, 4294901760
    %1763 = vmatpush1.msra.mxu0 %v1762
    %1764 = vmatprep.subr.mxu0 0.0
    %v1765 = vand.u32 %v62, 4294901760
    %1766 = vmatpush1.msra.mxu0 %v1765
    %1767 = vmatprep.subr.mxu0 0.0
    %v1768 = vand.u32 %v63, 4294901760
    %1769 = vmatpush1.msra.mxu0 %v1768
    %1770 = vmatprep.subr.mxu0 0.0
    %v1771 = vand.u32 %v64, 4294901760
    %1772 = vmatpush1.msra.mxu0 %v1771
    %1773 = vmatprep.subr.mxu0 0.0
    %v1774 = vand.u32 %v65, 4294901760
    %1775 = vmatpush1.msra.mxu0 %v1774
    %1776 = vmatprep.subr.mxu0 0.0
    %v1777 = vand.u32 %v66, 4294901760
    %1778 = vmatpush1.msra.mxu0 %v1777
    %1779 = vmatprep.subr.mxu0 0.0
    %v1780 = vand.u32 %v67, 4294901760
    %1781 = vmatpush1.msra.mxu0 %v1780
    %1782 = vmatprep.subr.mxu0 0.0
    %v1783 = vand.u32 %v68, 4294901760
    %1784 = vmatpush1.msra.mxu0 %v1783
    %1785 = vmatprep.subr.mxu0 0.0
    %v1786 = vand.u32 %v69, 4294901760
    %1787 = vmatpush1.msra.mxu0 %v1786
    %1788 = vmatprep.subr.mxu0 0.0
    %v1789 = vand.u32 %v70, 4294901760
    %1790 = vmatpush1.msra.mxu0 %v1789
    %1791 = vmatprep.subr.mxu0 0.0
    %v1792 = vand.u32 %v71, 4294901760
    %1793 = vmatpush1.msra.mxu0 %v1792
    %1794 = vmatprep.subr.mxu0 0.0
    %v1795 = vand.u32 %v72, 4294901760
    %1796 = vmatpush1.msra.mxu0 %v1795
    %1797 = vmatprep.subr.mxu0 0.0
    %v1798 = vand.u32 %v73, 4294901760
    %1799 = vmatpush1.msra.mxu0 %v1798
    %1800 = vmatprep.subr.mxu0 0.0
    %v1801 = vand.u32 %v74, 4294901760
    %1802 = vmatpush1.msra.mxu0 %v1801
    %1803 = vmatprep.subr.mxu0 0.0
    %v1804 = vand.u32 %v75, 4294901760
    %1805 = vmatpush1.msra.mxu0 %v1804
    %1806 = vmatprep.subr.mxu0 0.0
    %v1807 = vand.u32 %v76, 4294901760
    %1808 = vmatpush1.msra.mxu0 %v1807
    %1809 = vmatprep.subr.mxu0 0.0
    %v1810 = vand.u32 %v77, 4294901760
    %1811 = vmatpush1.msra.mxu0 %v1810
    %1812 = vmatprep.subr.mxu0 0.0
    %v1813 = vand.u32 %v78, 4294901760
    %1814 = vmatpush1.msra.mxu0 %v1813
    %1815 = vmatprep.subr.mxu0 0.0
    %v1816 = vand.u32 %v79, 4294901760
    %1817 = vmatpush1.msra.mxu0 %v1816
    %v1818 = vand.u32 %v97, 4294901760
    %1819 = vmatprep.mubr.f32.mxu0 %v1818
    %v1820 = vand.u32 %v95, 4294901760
    %1821 = vmatmul.mubr.f32.gmra.mrb[0].mxu0 %v1820
    %v1822 = vpop.f32.mrb[0].mxu0
    %v1823 = vadd.f32 %v1719, %v1822
    %v1824 = vpop.f32.mrb[0].mxu0
    %1825 = vdwg.mxu0
    %v1826 = vmul.f32 %v1823, 0.044194173
    %v1827 = vld [vmem:[%s2] sm:$0x1]
    %v1829 = vlaneseq
    %v1830 = vshrl.u32 %v1829, 7
    %v1831 = vsub.s32 0, %v1830
    %v1832 = vrot.slane %v1827, %v1831
    %v1834 = vadd.f32 %v1826, %v1832
    %vm1835 = vcmask 58368
    %1836 = vst.msk [vmem:[#allocation2] sm:$0x3] %vm1835, %v1834
    // Predicated region
    $region14: #{tpu_custom_call.1} parent=1 // pred_check
      _
    $region15: #{tpu_custom_call.1} parent=1 // pred_check_branch
      %1838 = sbr.rel (0) target = $region17
    $region16: #{tpu_custom_call.1} parent=1 // pred_region
      %s1840 = ssub.s32 32, 32
      %1841 = vsyncadd [#allocation3], %s1840
      %s1843 = sshll.u32 [#allocation2], 4
      %s1844 = int_to_ptr.vmem [resolvable:$true] %s1843
      %1846 = dma.vmem_to_hbm [thread:$0]  %s1844, 32, %s3, [#allocation3]
    $region17: #{tpu_custom_call.1} parent=1 // pred_fallthru
      _
    // Predicated region
    $region18: #{tpu_custom_call.1} parent=1 // pred_check
      _
    $region19: #{tpu_custom_call.1} parent=1 // pred_check_branch
      %1848 = sbr.rel (0) target = $region21
    $region20: #{tpu_custom_call.1} parent=1 // pred_region
      %1849 = dma.done [#allocation3], 32
    $region21: #{tpu_custom_call.1} parent=1 // pred_fallthru
      _
    %1850 = vsyncpa [#allocation3], 1

</llo_original>
